<compile_context>
chip_gen: v7x
topology: tpu7x:2x2x1
jax: 0.10.0
libtpu: 0.0.40
codegen_flags: <defaults>
</compile_context>

<pallas_src>
import functools

import numpy as np

import jax
import jax.numpy as jnp
from jax import lax
from jax.experimental import pallas as pl
from jax.experimental.pallas import tpu as pltpu

# ----------------------------- configuration -------------------------------
N_CLASSES = 2
N_ENVS = 2
Z_SIZE = 4
H_SIZES = (32, 32)                      # >= 2 equal hidden sizes (see assert)
IMG_C, IMG_H, IMG_W = 3, 16, 16
CNN_CHANNELS = (8, 16)
C1_H, C1_W = IMG_H // 2, IMG_W // 2                       # conv1 output: 8 x 8
FEAT_H, FEAT_W = IMG_H // 4, IMG_W // 4                   # conv2 output: 4 x 4
IMG_ENCODE_SIZE = CNN_CHANNELS[1] * FEAT_H * FEAT_W       # 256

HID = H_SIZES[0]
N_HEADS = 6                                               # {mu,off,diag} x {parent,child}
HTOT = N_HEADS * HID                                      # 192

Z, ZZ = Z_SIZE, Z_SIZE * Z_SIZE
OUT_SLAB = 128                                            # lane-dense output width
SLAB_MU_P, SLAB_COV_P = 0, Z                              # [0:4)   [4:20)
SLAB_MU_C, SLAB_COV_C = Z + ZZ, 2 * Z + ZZ                # [20:24) [24:40)
RAW_COLS = OUT_SLAB + 2 * (ZZ + Z)                        # 168: slab | off_p | off_c | dg_p | dg_c
UV_COLS = 2 * Z * ZZ                                      # 128 (head, q, k) product columns

ROW1_W = 3 * (IMG_W + 2) * IMG_C                          # 162: conv1 3-row window width
A1_W = C1_W * CNN_CHANNELS[0]                             # 64: conv1 output row width (ow, c)
A2_W = FEAT_W * CNN_CHANNELS[1]                           # 64: conv2 output row width (ow, c)

assert len(H_SIZES) >= 2 and all(h == HID for h in H_SIZES), \
    "fused head packing assumes >= 2 equal hidden sizes"
assert SLAB_COV_C + ZZ <= OUT_SLAB, "slab too narrow for this Z_SIZE"


# ------------------------------ fused kernel --------------------------------
def _encoder_fused_kernel(x1_ref, ye_ref, s2_ref, t_ref,
                          m1_ref, b1_ref, m2_ref, b2_ref,
                          w0_ref, w0y_ref, b0_ref,
                          wres_ref, bres_ref, wout_ref, bout_ref,
                          seli_ref, selj_ref, r_ref, d_ref,
                          o_ref, *, n_res):
    """conv1 + conv2 + six SkipMLP heads + both arr_to_cov epilogues, one call."""
    dot = functools.partial(jnp.dot, preferred_element_type=jnp.float32)

    # conv1 (3x3/s2/p1, 3->8): one matmul per 3-row window; rows = (b, out_row)
    a1 = jnp.maximum(dot(x1_ref[...], m1_ref[...]) + b1_ref[...], 0.0)      # (B*8, 64)

    # conv2 (3x3/s2/p1, 8->16): per-vertical-tap matmul (columns of m2), then
    # 0/1 row-selection matmuls align conv1 rows to conv2 output rows (the
    # out-of-range top row comes out as an all-zero selection row).
    a2pre = dot(a1, m2_ref[...])                                            # (B*8, 192)
    a2 = dot(s2_ref[0], a2pre[:, 0:A2_W])
    for ki in range(1, 3):
        a2 = a2 + dot(s2_ref[ki], a2pre[:, ki * A2_W:(ki + 1) * A2_W])
    a2 = jnp.maximum(a2 + b2_ref[...], 0.0)                                 # (B*4, 64)

    # first layer of all six heads: fold the (B*4, 64) row layout into the
    # per-image feature via 0/1 gather matmuls (no in-kernel reshape/relayout)
    h0 = dot(a2, w0_ref[...])                                               # (B*4, 768)
    h = dot(t_ref[0], h0[:, 0:HTOT])
    for oh in range(1, FEAT_H):
        h = h + dot(t_ref[oh], h0[:, oh * HTOT:(oh + 1) * HTOT])
    h = jnp.maximum(h + dot(ye_ref[...], w0y_ref[...]) + b0_ref[...], 0.0)  # (B, 192)

    # residual hidden layers: block-diagonal == per-head residual updates
    for l in range(n_res):
        h = h + jnp.maximum(dot(h, wres_ref[l]) + bres_ref[l], 0.0)

    # output layers: mu columns are already placed in the 128-wide slab (and
    # the +1e-6 cov-diagonal jitter rides in the bias); off/diag land in the
    # raw columns 128:168.
    raw = dot(h, wout_ref[...]) + bout_ref[...]                             # (B, 168)
    slab = raw[:, 0:OUT_SLAB]
    off_both = raw[:, OUT_SLAB:OUT_SLAB + 2 * ZZ]                           # (B, 32)
    diag_both = raw[:, OUT_SLAB + 2 * ZZ:RAW_COLS]                          # (B, 8)

    # arr_to_cov for BOTH heads in 4 pushes: U*V gram products summed over k
    # and scattered straight into the slab cov offsets; softplus(diag) placed
    # on the cov diagonals.
    u = dot(off_both, seli_ref[...])                                        # (B, 128)
    v = dot(off_both, selj_ref[...])                                        # (B, 128)
    slab = slab + dot(u * v, r_ref[...])
    slab = slab + dot(jax.nn.softplus(diag_both), d_ref[...])
    o_ref[...] = slab                                                       # (B, 128) full-width store


def _pallas_encoder_fused(x1, ye, s2, t, p):
    B = ye.shape[0]
    operands = (x1, ye, s2, t,
                p["m1"], p["b1r"], p["m2"], p["b2r"],
                p["w0cat"], p["w0y"], p["b0"],
                p["wres"], p["bres"], p["wout"], p["bout"],
                p["seli"], p["selj"], p["rmat"], p["dmat"])
    n_res = p["wres"].shape[0]
    kernel = functools.partial(_encoder_fused_kernel, n_res=n_res)
    # Everything fits comfortably in VMEM at these sizes, so every operand is
    # one full-array block and the grid is a single step.  For large B this
    # would become a ("parallel",) batch-row grid (tile x1/ye/s2/t/out over
    # batch, keep weight index_maps constant) -- mandatory on v7x to use both
    # TensorCores and to respect its 64 MiB VMEM.
    in_specs = [pl.BlockSpec(jnp.shape(a), lambda i, _nd=jnp.ndim(a): (0,) * _nd)
                for a in operands]
    return pl.pallas_call(
        kernel,
        out_shape=jax.ShapeDtypeStruct((B, OUT_SLAB), jnp.float32),
        grid=(1,),
        in_specs=in_specs,
        out_specs=pl.BlockSpec((B, OUT_SLAB), lambda i: (0, 0)),
        compiler_params=pltpu.CompilerParams(dimension_semantics=("arbitrary",)),
    )(*operands)


# ------------------------------ parameters ---------------------------------
def _init_linear(key, fan_in, fan_out):
    kw_, kb = jax.random.split(key)
    scale = 1.0 / jnp.sqrt(fan_in)
    w = jax.random.uniform(kw_, (fan_in, fan_out), jnp.float32, -scale, scale)
    b = jax.random.uniform(kb, (fan_out,), jnp.float32, -scale, scale)
    return w, b


def _init_conv(key, cout, cin, kh, kw):
    kw_, kb = jax.random.split(key)
    fan_in = cin * kh * kw
    scale = 1.0 / jnp.sqrt(fan_in)
    w = jax.random.uniform(kw_, (cout, cin, kh, kw), jnp.float32, -scale, scale)
    b = jax.random.uniform(kb, (cout,), jnp.float32, -scale, scale)
    return w, b


def _init_skip_mlp(key, in_size, h_sizes, out_size):
    keys = jax.random.split(key, len(h_sizes) + 1)
    hidden = []
    prev = in_size
    for k, h in zip(keys[:-1], h_sizes):
        hidden.append(_init_linear(k, prev, h))
        prev = h
    return {"hidden": hidden, "out": _init_linear(keys[-1], prev, out_size)}


def init_encoder_params(key):
    """Raw parameters in the PyTorch convention (OIHW conv weights, NCHW flatten)."""
    keys = jax.random.split(key, 8)
    ecnn = [
        _init_conv(keys[0], CNN_CHANNELS[0], IMG_C, 3, 3),
        _init_conv(keys[1], CNN_CHANNELS[1], CNN_CHANNELS[0], 3, 3),
    ]
    child_in = IMG_ENCODE_SIZE + N_CLASSES + N_ENVS
    return {
        "ecnn": ecnn,
        "mu_parent": _init_skip_mlp(keys[2], IMG_ENCODE_SIZE, H_SIZES, Z_SIZE),
        "offdiag_parent": _init_skip_mlp(keys[3], IMG_ENCODE_SIZE, H_SIZES, Z_SIZE ** 2),
        "diag_parent": _init_skip_mlp(keys[4], IMG_ENCODE_SIZE, H_SIZES, Z_SIZE),
        "mu_child": _init_skip_mlp(keys[5], child_in, H_SIZES, Z_SIZE),
        "offdiag_child": _init_skip_mlp(keys[6], child_in, H_SIZES, Z_SIZE ** 2),
        "diag_child": _init_skip_mlp(keys[7], child_in, H_SIZES, Z_SIZE),
    }


# --------------------------- one-time weight packing -------------------------
def _block_diag_np(mats):
    rows = sum(m.shape[0] for m in mats)
    cols = sum(m.shape[1] for m in mats)
    out = np.zeros((rows, cols), np.float32)
    r = c = 0
    for m in mats:
        out[r:r + m.shape[0], c:c + m.shape[1]] = m
        r += m.shape[0]
        c += m.shape[1]
    return out


def _nchw_rows_to_nhwc_rows(w):
    """Permute first-layer weight rows from the PyTorch NCHW-flatten order
    (c*16 + h*4 + w) to the NHWC-flatten order (h*64 + w*16 + c)."""
    n = w.shape[1]
    c, hh, ww = CNN_CHANNELS[-1], FEAT_H, FEAT_W
    return np.asarray(w, np.float32).reshape(c, hh, ww, n).transpose(1, 2, 0, 3).reshape(c * hh * ww, n)


def _conv1_as_matmul(w1, b1):
    """Scatter conv1 (OIHW) into a (162, 64) matrix acting on a 3-row padded
    window (cols ordered (ki, w_pad, c)); output cols ordered (ow, cout)."""
    cin, cout = IMG_C, CNN_CHANNELS[0]
    wp = IMG_W + 2
    m1 = np.zeros((3 * wp * cin, C1_W * cout), np.float32)
    w1 = np.asarray(w1, np.float32)
    for ki in range(3):
        for ow in range(C1_W):
            for kj in range(3):
                col_w = 2 * ow + kj                               # padded column index
                for c in range(cin):
                    m1[ki * wp * cin + col_w * cin + c,
                       ow * cout:(ow + 1) * cout] = w1[:, c, ki, kj]
    b1r = np.tile(np.asarray(b1, np.float32), C1_W).reshape(1, -1)
    return m1, b1r


def _conv2_as_matmul(w2, b2):
    """Scatter conv2 (OIHW) into a (64, 3*64) matrix: column block ki holds the
    vertical tap ki; horizontal taps + width padding are folded in by omission."""
    cin, cout = CNN_CHANNELS
    m2 = np.zeros((C1_W * cin, 3 * FEAT_W * cout), np.float32)
    w2 = np.asarray(w2, np.float32)
    for ki in range(3):
        for ow in range(FEAT_W):
            for kj in range(3):
                w = 2 * ow + kj - 1                               # unpadded conv1 column
                if 0 <= w < C1_W:
                    for c in range(cin):
                        m2[w * cin + c,
                           ki * FEAT_W * cout + ow * cout:
                           ki * FEAT_W * cout + (ow + 1) * cout] = w2[:, c, ki, kj]
    b2r = np.tile(np.asarray(b2, np.float32), FEAT_W).reshape(1, -1)
    return m2, b2r


def pack_encoder_params(raw):
    """One-time repack: conv tap matrices, NHWC-permuted + block-diagonal head
    weights, slab-placed output layer, and the 0/1 epilogue matrices."""
    m1, b1r = _conv1_as_matmul(*raw["ecnn"][0])
    m2, b2r = _conv2_as_matmul(*raw["ecnn"][1])

    heads = [raw["mu_parent"], raw["offdiag_parent"], raw["diag_parent"],
             raw["mu_child"], raw["offdiag_child"], raw["diag_child"]]
    n_ye = N_CLASSES + N_ENVS

    w0f_cols, w0y_cols, b0_cols = [], [], []
    for idx, hp in enumerate(heads):
        w0, b0 = [np.asarray(a, np.float32) for a in hp["hidden"][0]]
        w0f_cols.append(_nchw_rows_to_nhwc_rows(w0[:IMG_ENCODE_SIZE]))
        if idx >= 3:                                      # child heads also see [y, e]
            w0y_cols.append(w0[IMG_ENCODE_SIZE:])
        else:                                             # parent heads: zero y/e weights
            w0y_cols.append(np.zeros((n_ye, HID), np.float32))
        b0_cols.append(b0)
    w0f = np.concatenate(w0f_cols, axis=1)                                   # (256, 192)
    w0cat = np.concatenate([w0f[A2_W * oh:A2_W * (oh + 1), :]
                            for oh in range(FEAT_H)], axis=1)                # (64, 768)
    w0y = np.concatenate(w0y_cols, axis=1)                                   # (4, 192)
    b0 = np.concatenate(b0_cols).reshape(1, -1)                              # (1, 192)

    n_res = len(H_SIZES) - 1
    wres = np.stack([_block_diag_np([np.asarray(hp["hidden"][l + 1][0], np.float32)
                                     for hp in heads]) for l in range(n_res)])
    bres = np.stack([np.concatenate([np.asarray(hp["hidden"][l + 1][1], np.float32)
                                     for hp in heads]).reshape(1, -1) for l in range(n_res)])

    # Extended output layer: mu columns placed directly in the slab, off/diag
    # raw values in columns 128:168, +1e-6 jitter carried by the bias.
    wout = np.zeros((HTOT, RAW_COLS), np.float32)
    bout = np.zeros((1, RAW_COLS), np.float32)
    col_ranges = [
        (SLAB_MU_P, SLAB_MU_P + Z),                       # mu_parent   -> slab
        (OUT_SLAB, OUT_SLAB + ZZ),                        # off_parent  -> raw
        (OUT_SLAB + 2 * ZZ, OUT_SLAB + 2 * ZZ + Z),       # diag_parent -> raw
        (SLAB_MU_C, SLAB_MU_C + Z),                       # mu_child    -> slab
        (OUT_SLAB + ZZ, OUT_SLAB + 2 * ZZ),               # off_child   -> raw
        (OUT_SLAB + 2 * ZZ + Z, RAW_COLS),                # diag_child  -> raw
    ]
    for idx, (hp, (c0, c_end)) in enumerate(zip(heads, col_ranges)):
        wo, bo = [np.asarray(a, np.float32) for a in hp["out"]]
        wout[idx * HID:(idx + 1) * HID, c0:c_end] = wo
        bout[0, c0:c_end] = bo
    for cov_off in (SLAB_COV_P, SLAB_COV_C):
        for i in range(Z):
            bout[0, cov_off + i * Z + i] += 1e-6

    # Epilogue 0/1 matrices: SelI/SelJ expand off_flat into (head, q, k)
    # products, R sums over k and scatters into the slab cov offsets, D places
    # softplus(diag) on the cov diagonals.
    seli = np.zeros((2 * ZZ, UV_COLS), np.float32)
    selj = np.zeros((2 * ZZ, UV_COLS), np.float32)
    rmat = np.zeros((UV_COLS, OUT_SLAB), np.float32)
    dmat = np.zeros((2 * Z, OUT_SLAB), np.float32)
    for hsel, cov_off in ((0, SLAB_COV_P), (1, SLAB_COV_C)):
        for q in range(ZZ):
            i_q, j_q = q // Z, q % Z
            for k in range(Z):
                col = hsel * Z * ZZ + q * Z + k
                seli[hsel * ZZ + i_q * Z + k, col] = 1.0
                selj[hsel * ZZ + j_q * Z + k, col] = 1.0
                rmat[col, cov_off + q] = 1.0
        for i in range(Z):
            dmat[hsel * Z + i, cov_off + i * Z + i] = 1.0

    pack = {"m1": m1, "b1r": b1r, "m2": m2, "b2r": b2r,
            "w0cat": w0cat, "w0y": w0y, "b0": b0,
            "wres": wres, "bres": bres, "wout": wout, "bout": bout,
            "seli": seli, "selj": selj, "rmat": rmat, "dmat": dmat}
    return {k: jnp.asarray(v, jnp.float32) for k, v in pack.items()}


def _geom_mats(batch):
    """Batch-dependent 0/1 gather matrices (built at trace time, B is static):
    S2[ki] selects conv1 row (2*oh + ki - 1) per image (zero row when out of
    range = top zero-padding); T[oh] gathers conv2 row oh of each image."""
    s2 = np.zeros((3, batch * FEAT_H, batch * C1_H), np.float32)
    for ki in range(3):
        for b in range(batch):
            for oh in range(FEAT_H):
                r = 2 * oh + ki - 1
                if 0 <= r < C1_H:
                    s2[ki, b * FEAT_H + oh, b * C1_H + r] = 1.0
    t = np.zeros((FEAT_H, batch, batch * FEAT_H), np.float32)
    for oh in range(FEAT_H):
        for b in range(batch):
            t[oh, b, b * FEAT_H + oh] = 1.0
    return s2, t


# ------------------------------ forward pass --------------------------------
def encoder_forward(params, x, y, e):
    B = x.shape[0]
    # Input prep (pure layout glue on the ~3 KB input): NCHW -> NHWC, pad H/W
    # by 1, then stack the 3-row window for each conv1 output row.
    xh = jnp.transpose(x, (0, 2, 3, 1))                                  # (B,16,16,3)
    xp = jnp.pad(xh, ((0, 0), (1, 1), (1, 1), (0, 0)))                   # (B,18,18,3)
    xrows = xp.reshape(B, IMG_H + 2, (IMG_W + 2) * IMG_C)                # (B,18,54)
    x1 = jnp.stack([xrows[:, 2 * r:2 * r + 3, :] for r in range(C1_H)], axis=1)
    x1 = x1.reshape(B * C1_H, ROW1_W)                                    # (B*8, 162)

    y1 = jax.nn.one_hot(y, N_CLASSES, dtype=jnp.float32)
    e1 = jax.nn.one_hot(e, N_ENVS, dtype=jnp.float32)
    ye = jnp.concatenate([y1, e1], axis=1)                               # (B, 4)

    s2, t = _geom_mats(B)
    slab = _pallas_encoder_fused(x1, ye, s2, t, params)                  # (B, 128)

    mu_p = slab[:, SLAB_MU_P:SLAB_MU_P + Z]
    cov_p = slab[:, SLAB_COV_P:SLAB_COV_P + ZZ].reshape(B, Z, Z)
    mu_c = slab[:, SLAB_MU_C:SLAB_MU_C + Z]
    cov_c = slab[:, SLAB_COV_C:SLAB_COV_C + ZZ].reshape(B, Z, Z)
    # TODO(synk): torch.distributions.MultivariateNormal has no Pallas/JAX
    # equivalent here; the distributions are returned as (mu, cov) tuples.
    return (mu_p, cov_p), (mu_c, cov_c)


# ------------------- pure-XLA high-precision reference ----------------------
def _ref_skip_mlp(p, x):
    hp = lax.Precision.HIGHEST
    w0, b0 = p["hidden"][0]
    h = jax.nn.relu(jnp.dot(x, w0, precision=hp) + b0)
    for w, b in p["hidden"][1:]:
        h = h + jax.nn.relu(jnp.dot(h, w, precision=hp) + b)
    wo, bo = p["out"]
    return jnp.dot(h, wo, precision=hp) + bo


def _ref_cov(off, diag):
    gram = jnp.einsum("bij,bkj->bik", off, off, precision=lax.Precision.HIGHEST)
    return gram + (jax.nn.softplus(diag) + 1e-6)[:, :, None] * jnp.eye(Z_SIZE)


def reference_forward(raw, x, y, e):
    hp = lax.Precision.HIGHEST
    h = x
    for w, b in raw["ecnn"]:
        h = lax.conv_general_dilated(h, w, (2, 2), ((1, 1), (1, 1)),
                                     dimension_numbers=("NCHW", "OIHW", "NCHW"),
                                     precision=hp)
        h = jax.nn.relu(h + b[None, :, None, None])
    B = x.shape[0]
    feat = h.reshape(B, -1)                               # PyTorch NCHW flatten
    y1 = jax.nn.one_hot(y, N_CLASSES, dtype=jnp.float32)
    e1 = jax.nn.one_hot(e, N_ENVS, dtype=jnp.float32)
    xc = jnp.concatenate([feat, y1, e1], axis=1)
    mu_p = _ref_skip_mlp(raw["mu_parent"], feat)
    cov_p = _ref_cov(_ref_skip_mlp(raw["offdiag_parent"], feat).reshape(B, Z_SIZE, Z_SIZE),
                     _ref_skip_mlp(raw["diag_parent"], feat))
    mu_c = _ref_skip_mlp(raw["mu_child"], xc)
    cov_c = _ref_cov(_ref_skip_mlp(raw["offdiag_child"], xc).reshape(B, Z_SIZE, Z_SIZE),
                     _ref_skip_mlp(raw["diag_child"], xc))
    return (mu_p, cov_p), (mu_c, cov_c)


# ---------------------------------- main ------------------------------------
if __name__ == "__main__":
    key = jax.random.PRNGKey(0)
    pkey, xkey, ykey, ekey = jax.random.split(key, 4)

    raw_params = init_encoder_params(pkey)
    params = pack_encoder_params(raw_params)

    batch = 2
    x = jax.random.normal(xkey, (batch, IMG_C, IMG_H, IMG_W), jnp.float32)
    y = jax.random.randint(ykey, (batch,), 0, N_CLASSES)
    e = jax.random.randint(ekey, (batch,), 0, N_ENVS)

    fwd = jax.jit(encoder_forward)
    (mu_p, cov_p), (mu_c, cov_c) = fwd(params, x, y, e)
    jax.block_until_ready((mu_p, cov_p, mu_c, cov_c))

    assert mu_p.shape == (batch, Z_SIZE) and mu_c.shape == (batch, Z_SIZE)
    assert cov_p.shape == (batch, Z_SIZE, Z_SIZE) and cov_c.shape == (batch, Z_SIZE, Z_SIZE)
    for arr in (mu_p, cov_p, mu_c, cov_c):
        assert bool(jnp.all(jnp.isfinite(arr)))

    # Cross-check the fused Pallas path against a plain high-precision XLA
    # implementation of the original module semantics (NCHW conv + per-head
    # SkipMLPs + arr_to_cov).  Tolerance reflects default MXU precision in
    # the fused path vs Precision.HIGHEST in the reference.
    (r_mu_p, r_cov_p), (r_mu_c, r_cov_c) = reference_forward(raw_params, x, y, e)
    for got, ref in ((mu_p, r_mu_p), (cov_p, r_cov_p), (mu_c, r_mu_c), (cov_c, r_cov_c)):
        assert bool(jnp.allclose(got, ref, atol=3e-3, rtol=3e-3))

    print("KERNEL_OK")
</pallas_src>

<mosaic_0001>
module attributes {stable_mosaic.version = 11 : i64} {
  func.func @_encoder_fused_kernel(%arg0: i32, %arg1: memref<16x162xf32, #tpu.memory_space<vmem>>, %arg2: memref<2x4xf32, #tpu.memory_space<vmem>>, %arg3: memref<3x8x16xf32, #tpu.memory_space<vmem>>, %arg4: memref<4x2x8xf32, #tpu.memory_space<vmem>>, %arg5: memref<162x64xf32, #tpu.memory_space<vmem>>, %arg6: memref<1x64xf32, #tpu.memory_space<vmem>>, %arg7: memref<64x192xf32, #tpu.memory_space<vmem>>, %arg8: memref<1x64xf32, #tpu.memory_space<vmem>>, %arg9: memref<64x768xf32, #tpu.memory_space<vmem>>, %arg10: memref<4x192xf32, #tpu.memory_space<vmem>>, %arg11: memref<1x192xf32, #tpu.memory_space<vmem>>, %arg12: memref<1x192x192xf32, #tpu.memory_space<vmem>>, %arg13: memref<1x1x192xf32, #tpu.memory_space<vmem>>, %arg14: memref<192x168xf32, #tpu.memory_space<vmem>>, %arg15: memref<1x168xf32, #tpu.memory_space<vmem>>, %arg16: memref<32x128xf32, #tpu.memory_space<vmem>>, %arg17: memref<32x128xf32, #tpu.memory_space<vmem>>, %arg18: memref<128x128xf32, #tpu.memory_space<vmem>>, %arg19: memref<8x128xf32, #tpu.memory_space<vmem>>, %arg20: memref<2x128xf32, #tpu.memory_space<vmem>>) attributes {dimension_semantics = [#tpu.dimension_semantics<arbitrary>], iteration_bounds = array<i64: 1>, scalar_prefetch = 0 : i64, scratch_operands = 0 : i64, tpu.core_type = #tpu.core_type<tc>, window_params = [{pipeline_mode = #tpu.pipeline_mode<synchronous>, transform_indices = @transform_0, window_bounds = array<i64: 16, 162>}, {pipeline_mode = #tpu.pipeline_mode<synchronous>, transform_indices = @transform_1, window_bounds = array<i64: 2, 4>}, {pipeline_mode = #tpu.pipeline_mode<synchronous>, transform_indices = @transform_2, window_bounds = array<i64: 3, 8, 16>}, {pipeline_mode = #tpu.pipeline_mode<synchronous>, transform_indices = @transform_3, window_bounds = array<i64: 4, 2, 8>}, {pipeline_mode = #tpu.pipeline_mode<synchronous>, transform_indices = @transform_4, window_bounds = array<i64: 162, 64>}, {pipeline_mode = #tpu.pipeline_mode<synchronous>, transform_indices = @transform_5, window_bounds = array<i64: 1, 64>}, {pipeline_mode = #tpu.pipeline_mode<synchronous>, transform_indices = @transform_6, window_bounds = array<i64: 64, 192>}, {pipeline_mode = #tpu.pipeline_mode<synchronous>, transform_indices = @transform_7, window_bounds = array<i64: 1, 64>}, {pipeline_mode = #tpu.pipeline_mode<synchronous>, transform_indices = @transform_8, window_bounds = array<i64: 64, 768>}, {pipeline_mode = #tpu.pipeline_mode<synchronous>, transform_indices = @transform_9, window_bounds = array<i64: 4, 192>}, {pipeline_mode = #tpu.pipeline_mode<synchronous>, transform_indices = @transform_10, window_bounds = array<i64: 1, 192>}, {pipeline_mode = #tpu.pipeline_mode<synchronous>, transform_indices = @transform_11, window_bounds = array<i64: 1, 192, 192>}, {pipeline_mode = #tpu.pipeline_mode<synchronous>, transform_indices = @transform_12, window_bounds = array<i64: 1, 1, 192>}, {pipeline_mode = #tpu.pipeline_mode<synchronous>, transform_indices = @transform_13, window_bounds = array<i64: 192, 168>}, {pipeline_mode = #tpu.pipeline_mode<synchronous>, transform_indices = @transform_14, window_bounds = array<i64: 1, 168>}, {pipeline_mode = #tpu.pipeline_mode<synchronous>, transform_indices = @transform_15, window_bounds = array<i64: 32, 128>}, {pipeline_mode = #tpu.pipeline_mode<synchronous>, transform_indices = @transform_16, window_bounds = array<i64: 32, 128>}, {pipeline_mode = #tpu.pipeline_mode<synchronous>, transform_indices = @transform_17, window_bounds = array<i64: 128, 128>}, {pipeline_mode = #tpu.pipeline_mode<synchronous>, transform_indices = @transform_18, window_bounds = array<i64: 8, 128>}, {pipeline_mode = #tpu.pipeline_mode<synchronous>, transform_indices = @transform_19, window_bounds = array<i64: 2, 128>}]} {
    %c0 = arith.constant 0 : index
    %c0_0 = arith.constant 0 : index
    %0 = vector.load %arg1[%c0, %c0_0] : memref<16x162xf32, #tpu.memory_space<vmem>>, vector<16x162xf32>
    %c0_1 = arith.constant 0 : index
    %c0_2 = arith.constant 0 : index
    %1 = vector.load %arg5[%c0_1, %c0_2] : memref<162x64xf32, #tpu.memory_space<vmem>>, vector<162x64xf32>
    %cst = arith.constant dense<0.000000e+00> : vector<16x64xf32>
    %2 = tpu.matmul %0, %1, %cst {dimension_numbers = #tpu.dot_dimension_numbers<[1], [0], [0], [1], [0, 0, 1, 1], [], []>} : vector<16x162xf32>, vector<162x64xf32>, vector<16x64xf32> -> vector<16x64xf32>
    %c0_3 = arith.constant 0 : index
    %c0_4 = arith.constant 0 : index
    %3 = vector.load %arg6[%c0_3, %c0_4] : memref<1x64xf32, #tpu.memory_space<vmem>>, vector<1x64xf32>
    %4 = vector.broadcast %3 : vector<1x64xf32> to vector<16x64xf32>
    %5 = arith.addf %2, %4 : vector<16x64xf32>
    %cst_5 = arith.constant 0.000000e+00 : f32
    %6 = vector.broadcast %cst_5 : f32 to vector<16x64xf32>
    %7 = arith.maximumf %5, %6 : vector<16x64xf32>
    %c0_6 = arith.constant 0 : index
    %c0_7 = arith.constant 0 : index
    %8 = vector.load %arg7[%c0_6, %c0_7] : memref<64x192xf32, #tpu.memory_space<vmem>>, vector<64x192xf32>
    %cst_8 = arith.constant dense<0.000000e+00> : vector<16x192xf32>
    %9 = tpu.matmul %7, %8, %cst_8 {dimension_numbers = #tpu.dot_dimension_numbers<[1], [0], [0], [1], [0, 0, 1, 1], [], []>} : vector<16x64xf32>, vector<64x192xf32>, vector<16x192xf32> -> vector<16x192xf32>
    %c0_9 = arith.constant 0 : index
    %c0_10 = arith.constant 0 : index
    %c0_11 = arith.constant 0 : index
    %10 = vector.load %arg3[%c0_9, %c0_10, %c0_11] : memref<3x8x16xf32, #tpu.memory_space<vmem>>, vector<1x8x16xf32>
    %11 = vector.shape_cast %10 : vector<1x8x16xf32> to vector<8x16xf32>
    %12 = vector.extract_strided_slice %9 {offsets = [0, 0], sizes = [16, 64], strides = [1, 1]} : vector<16x192xf32> to vector<16x64xf32>
    %cst_12 = arith.constant dense<0.000000e+00> : vector<8x64xf32>
    %13 = tpu.matmul %11, %12, %cst_12 {dimension_numbers = #tpu.dot_dimension_numbers<[1], [0], [0], [1], [0, 0, 1, 1], [], []>} : vector<8x16xf32>, vector<16x64xf32>, vector<8x64xf32> -> vector<8x64xf32>
    %c1 = arith.constant 1 : index
    %c0_13 = arith.constant 0 : index
    %c0_14 = arith.constant 0 : index
    %14 = vector.load %arg3[%c1, %c0_13, %c0_14] : memref<3x8x16xf32, #tpu.memory_space<vmem>>, vector<1x8x16xf32>
    %15 = vector.shape_cast %14 : vector<1x8x16xf32> to vector<8x16xf32>
    %16 = vector.extract_strided_slice %9 {offsets = [0, 64], sizes = [16, 64], strides = [1, 1]} : vector<16x192xf32> to vector<16x64xf32>
    %cst_15 = arith.constant dense<0.000000e+00> : vector<8x64xf32>
    %17 = tpu.matmul %15, %16, %cst_15 {dimension_numbers = #tpu.dot_dimension_numbers<[1], [0], [0], [1], [0, 0, 1, 1], [], []>} : vector<8x16xf32>, vector<16x64xf32>, vector<8x64xf32> -> vector<8x64xf32>
    %18 = arith.addf %13, %17 : vector<8x64xf32>
    %c2 = arith.constant 2 : index
    %c0_16 = arith.constant 0 : index
    %c0_17 = arith.constant 0 : index
    %19 = vector.load %arg3[%c2, %c0_16, %c0_17] : memref<3x8x16xf32, #tpu.memory_space<vmem>>, vector<1x8x16xf32>
    %20 = vector.shape_cast %19 : vector<1x8x16xf32> to vector<8x16xf32>
    %21 = vector.extract_strided_slice %9 {offsets = [0, 128], sizes = [16, 64], strides = [1, 1]} : vector<16x192xf32> to vector<16x64xf32>
    %cst_18 = arith.constant dense<0.000000e+00> : vector<8x64xf32>
    %22 = tpu.matmul %20, %21, %cst_18 {dimension_numbers = #tpu.dot_dimension_numbers<[1], [0], [0], [1], [0, 0, 1, 1], [], []>} : vector<8x16xf32>, vector<16x64xf32>, vector<8x64xf32> -> vector<8x64xf32>
    %23 = arith.addf %18, %22 : vector<8x64xf32>
    %c0_19 = arith.constant 0 : index
    %c0_20 = arith.constant 0 : index
    %24 = vector.load %arg8[%c0_19, %c0_20] : memref<1x64xf32, #tpu.memory_space<vmem>>, vector<1x64xf32>
    %25 = vector.broadcast %24 : vector<1x64xf32> to vector<8x64xf32>
    %26 = arith.addf %23, %25 : vector<8x64xf32>
    %cst_21 = arith.constant 0.000000e+00 : f32
    %27 = vector.broadcast %cst_21 : f32 to vector<8x64xf32>
    %28 = arith.maximumf %26, %27 : vector<8x64xf32>
    %c0_22 = arith.constant 0 : index
    %c0_23 = arith.constant 0 : index
    %29 = vector.load %arg9[%c0_22, %c0_23] : memref<64x768xf32, #tpu.memory_space<vmem>>, vector<64x768xf32>
    %cst_24 = arith.constant dense<0.000000e+00> : vector<8x768xf32>
    %30 = tpu.matmul %28, %29, %cst_24 {dimension_numbers = #tpu.dot_dimension_numbers<[1], [0], [0], [1], [0, 0, 1, 1], [], []>} : vector<8x64xf32>, vector<64x768xf32>, vector<8x768xf32> -> vector<8x768xf32>
    %c0_25 = arith.constant 0 : index
    %c0_26 = arith.constant 0 : index
    %c0_27 = arith.constant 0 : index
    %31 = vector.load %arg4[%c0_25, %c0_26, %c0_27] : memref<4x2x8xf32, #tpu.memory_space<vmem>>, vector<1x2x8xf32>
    %32 = vector.shape_cast %31 : vector<1x2x8xf32> to vector<2x8xf32>
    %33 = vector.extract_strided_slice %30 {offsets = [0, 0], sizes = [8, 192], strides = [1, 1]} : vector<8x768xf32> to vector<8x192xf32>
    %cst_28 = arith.constant dense<0.000000e+00> : vector<2x192xf32>
    %34 = tpu.matmul %32, %33, %cst_28 {dimension_numbers = #tpu.dot_dimension_numbers<[1], [0], [0], [1], [0, 0, 1, 1], [], []>} : vector<2x8xf32>, vector<8x192xf32>, vector<2x192xf32> -> vector<2x192xf32>
    %c1_29 = arith.constant 1 : index
    %c0_30 = arith.constant 0 : index
    %c0_31 = arith.constant 0 : index
    %35 = vector.load %arg4[%c1_29, %c0_30, %c0_31] : memref<4x2x8xf32, #tpu.memory_space<vmem>>, vector<1x2x8xf32>
    %36 = vector.shape_cast %35 : vector<1x2x8xf32> to vector<2x8xf32>
    %37 = vector.extract_strided_slice %30 {offsets = [0, 192], sizes = [8, 192], strides = [1, 1]} : vector<8x768xf32> to vector<8x192xf32>
    %cst_32 = arith.constant dense<0.000000e+00> : vector<2x192xf32>
    %38 = tpu.matmul %36, %37, %cst_32 {dimension_numbers = #tpu.dot_dimension_numbers<[1], [0], [0], [1], [0, 0, 1, 1], [], []>} : vector<2x8xf32>, vector<8x192xf32>, vector<2x192xf32> -> vector<2x192xf32>
    %39 = arith.addf %34, %38 : vector<2x192xf32>
    %c2_33 = arith.constant 2 : index
    %c0_34 = arith.constant 0 : index
    %c0_35 = arith.constant 0 : index
    %40 = vector.load %arg4[%c2_33, %c0_34, %c0_35] : memref<4x2x8xf32, #tpu.memory_space<vmem>>, vector<1x2x8xf32>
    %41 = vector.shape_cast %40 : vector<1x2x8xf32> to vector<2x8xf32>
    %42 = vector.extract_strided_slice %30 {offsets = [0, 384], sizes = [8, 192], strides = [1, 1]} : vector<8x768xf32> to vector<8x192xf32>
    %cst_36 = arith.constant dense<0.000000e+00> : vector<2x192xf32>
    %43 = tpu.matmul %41, %42, %cst_36 {dimension_numbers = #tpu.dot_dimension_numbers<[1], [0], [0], [1], [0, 0, 1, 1], [], []>} : vector<2x8xf32>, vector<8x192xf32>, vector<2x192xf32> -> vector<2x192xf32>
    %44 = arith.addf %39, %43 : vector<2x192xf32>
    %c3 = arith.constant 3 : index
    %c0_37 = arith.constant 0 : index
    %c0_38 = arith.constant 0 : index
    %45 = vector.load %arg4[%c3, %c0_37, %c0_38] : memref<4x2x8xf32, #tpu.memory_space<vmem>>, vector<1x2x8xf32>
    %46 = vector.shape_cast %45 : vector<1x2x8xf32> to vector<2x8xf32>
    %47 = vector.extract_strided_slice %30 {offsets = [0, 576], sizes = [8, 192], strides = [1, 1]} : vector<8x768xf32> to vector<8x192xf32>
    %cst_39 = arith.constant dense<0.000000e+00> : vector<2x192xf32>
    %48 = tpu.matmul %46, %47, %cst_39 {dimension_numbers = #tpu.dot_dimension_numbers<[1], [0], [0], [1], [0, 0, 1, 1], [], []>} : vector<2x8xf32>, vector<8x192xf32>, vector<2x192xf32> -> vector<2x192xf32>
    %49 = arith.addf %44, %48 : vector<2x192xf32>
    %c0_40 = arith.constant 0 : index
    %c0_41 = arith.constant 0 : index
    %50 = vector.load %arg2[%c0_40, %c0_41] : memref<2x4xf32, #tpu.memory_space<vmem>>, vector<2x4xf32>
    %c0_42 = arith.constant 0 : index
    %c0_43 = arith.constant 0 : index
    %51 = vector.load %arg10[%c0_42, %c0_43] : memref<4x192xf32, #tpu.memory_space<vmem>>, vector<4x192xf32>
    %cst_44 = arith.constant dense<0.000000e+00> : vector<2x192xf32>
    %52 = tpu.matmul %50, %51, %cst_44 {dimension_numbers = #tpu.dot_dimension_numbers<[1], [0], [0], [1], [0, 0, 1, 1], [], []>} : vector<2x4xf32>, vector<4x192xf32>, vector<2x192xf32> -> vector<2x192xf32>
    %53 = arith.addf %49, %52 : vector<2x192xf32>
    %c0_45 = arith.constant 0 : index
    %c0_46 = arith.constant 0 : index
    %54 = vector.load %arg11[%c0_45, %c0_46] : memref<1x192xf32, #tpu.memory_space<vmem>>, vector<1x192xf32>
    %55 = vector.broadcast %54 : vector<1x192xf32> to vector<2x192xf32>
    %56 = arith.addf %53, %55 : vector<2x192xf32>
    %cst_47 = arith.constant 0.000000e+00 : f32
    %57 = vector.broadcast %cst_47 : f32 to vector<2x192xf32>
    %58 = arith.maximumf %56, %57 : vector<2x192xf32>
    %c0_48 = arith.constant 0 : index
    %c0_49 = arith.constant 0 : index
    %c0_50 = arith.constant 0 : index
    %59 = vector.load %arg12[%c0_48, %c0_49, %c0_50] : memref<1x192x192xf32, #tpu.memory_space<vmem>>, vector<1x192x192xf32>
    %60 = vector.shape_cast %59 : vector<1x192x192xf32> to vector<192x192xf32>
    %cst_51 = arith.constant dense<0.000000e+00> : vector<2x192xf32>
    %61 = tpu.matmul %58, %60, %cst_51 {dimension_numbers = #tpu.dot_dimension_numbers<[1], [0], [0], [1], [0, 0, 1, 1], [], []>} : vector<2x192xf32>, vector<192x192xf32>, vector<2x192xf32> -> vector<2x192xf32>
    %c0_52 = arith.constant 0 : index
    %c0_53 = arith.constant 0 : index
    %c0_54 = arith.constant 0 : index
    %62 = vector.load %arg13[%c0_52, %c0_53, %c0_54] : memref<1x1x192xf32, #tpu.memory_space<vmem>>, vector<1x1x192xf32>
    %63 = vector.shape_cast %62 : vector<1x1x192xf32> to vector<1x192xf32>
    %64 = vector.broadcast %63 : vector<1x192xf32> to vector<2x192xf32>
    %65 = arith.addf %61, %64 : vector<2x192xf32>
    %cst_55 = arith.constant 0.000000e+00 : f32
    %66 = vector.broadcast %cst_55 : f32 to vector<2x192xf32>
    %67 = arith.maximumf %65, %66 : vector<2x192xf32>
    %68 = arith.addf %58, %67 : vector<2x192xf32>
    %c0_56 = arith.constant 0 : index
    %c0_57 = arith.constant 0 : index
    %69 = vector.load %arg14[%c0_56, %c0_57] : memref<192x168xf32, #tpu.memory_space<vmem>>, vector<192x168xf32>
    %cst_58 = arith.constant dense<0.000000e+00> : vector<2x168xf32>
    %70 = tpu.matmul %68, %69, %cst_58 {dimension_numbers = #tpu.dot_dimension_numbers<[1], [0], [0], [1], [0, 0, 1, 1], [], []>} : vector<2x192xf32>, vector<192x168xf32>, vector<2x168xf32> -> vector<2x168xf32>
    %c0_59 = arith.constant 0 : index
    %c0_60 = arith.constant 0 : index
    %71 = vector.load %arg15[%c0_59, %c0_60] : memref<1x168xf32, #tpu.memory_space<vmem>>, vector<1x168xf32>
    %72 = vector.broadcast %71 : vector<1x168xf32> to vector<2x168xf32>
    %73 = arith.addf %70, %72 : vector<2x168xf32>
    %74 = vector.extract_strided_slice %73 {offsets = [0, 0], sizes = [2, 128], strides = [1, 1]} : vector<2x168xf32> to vector<2x128xf32>
    %75 = vector.extract_strided_slice %73 {offsets = [0, 128], sizes = [2, 32], strides = [1, 1]} : vector<2x168xf32> to vector<2x32xf32>
    %76 = vector.extract_strided_slice %73 {offsets = [0, 160], sizes = [2, 8], strides = [1, 1]} : vector<2x168xf32> to vector<2x8xf32>
    %c0_61 = arith.constant 0 : index
    %c0_62 = arith.constant 0 : index
    %77 = vector.load %arg16[%c0_61, %c0_62] : memref<32x128xf32, #tpu.memory_space<vmem>>, vector<32x128xf32>
    %cst_63 = arith.constant dense<0.000000e+00> : vector<2x128xf32>
    %78 = tpu.matmul %75, %77, %cst_63 {dimension_numbers = #tpu.dot_dimension_numbers<[1], [0], [0], [1], [0, 0, 1, 1], [], []>} : vector<2x32xf32>, vector<32x128xf32>, vector<2x128xf32> -> vector<2x128xf32>
    %c0_64 = arith.constant 0 : index
    %c0_65 = arith.constant 0 : index
    %79 = vector.load %arg17[%c0_64, %c0_65] : memref<32x128xf32, #tpu.memory_space<vmem>>, vector<32x128xf32>
    %cst_66 = arith.constant dense<0.000000e+00> : vector<2x128xf32>
    %80 = tpu.matmul %75, %79, %cst_66 {dimension_numbers = #tpu.dot_dimension_numbers<[1], [0], [0], [1], [0, 0, 1, 1], [], []>} : vector<2x32xf32>, vector<32x128xf32>, vector<2x128xf32> -> vector<2x128xf32>
    %81 = arith.mulf %78, %80 : vector<2x128xf32>
    %c0_67 = arith.constant 0 : index
    %c0_68 = arith.constant 0 : index
    %82 = vector.load %arg18[%c0_67, %c0_68] : memref<128x128xf32, #tpu.memory_space<vmem>>, vector<128x128xf32>
    %cst_69 = arith.constant dense<0.000000e+00> : vector<2x128xf32>
    %83 = tpu.matmul %81, %82, %cst_69 {dimension_numbers = #tpu.dot_dimension_numbers<[1], [0], [0], [1], [0, 0, 1, 1], [], []>} : vector<2x128xf32>, vector<128x128xf32>, vector<2x128xf32> -> vector<2x128xf32>
    %84 = arith.addf %74, %83 : vector<2x128xf32>
    %cst_70 = arith.constant 0.000000e+00 : f32
    %85 = vector.broadcast %cst_70 : f32 to vector<2x8xf32>
    %86 = arith.maximumf %76, %85 : vector<2x8xf32>
    %87 = vector.broadcast %cst_70 : f32 to vector<2x8xf32>
    %88 = arith.subf %76, %87 : vector<2x8xf32>
    %89 = arith.cmpf one, %88, %88 : vector<2x8xf32>
    %90 = vector.broadcast %cst_70 : f32 to vector<2x8xf32>
    %91 = arith.addf %76, %90 : vector<2x8xf32>
    %92 = math.absf %88 : vector<2x8xf32>
    %cst_71 = arith.constant 0.000000e+00 : f32
    %93 = vector.broadcast %cst_71 : f32 to vector<2x8xf32>
    %94 = arith.subf %93, %92 : vector<2x8xf32>
    %95 = math.exp %94 : vector<2x8xf32>
    %96 = math.log1p %95 : vector<2x8xf32>
    %97 = arith.addf %86, %96 : vector<2x8xf32>
    %98 = arith.select %89, %91, %97 : vector<2x8xi1>, vector<2x8xf32>
    %c0_72 = arith.constant 0 : index
    %c0_73 = arith.constant 0 : index
    %99 = vector.load %arg19[%c0_72, %c0_73] : memref<8x128xf32, #tpu.memory_space<vmem>>, vector<8x128xf32>
    %cst_74 = arith.constant dense<0.000000e+00> : vector<2x128xf32>
    %100 = tpu.matmul %98, %99, %cst_74 {dimension_numbers = #tpu.dot_dimension_numbers<[1], [0], [0], [1], [0, 0, 1, 1], [], []>} : vector<2x8xf32>, vector<8x128xf32>, vector<2x128xf32> -> vector<2x128xf32>
    %101 = arith.addf %84, %100 : vector<2x128xf32>
    %c0_75 = arith.constant 0 : index
    %c0_76 = arith.constant 0 : index
    %102 = vector.load %arg20[%c0_75, %c0_76] : memref<2x128xf32, #tpu.memory_space<vmem>>, vector<2x128xf32>
    tpu.vector_store %arg20[%c0_75, %c0_76], %101 {strides = array<i32>} : memref<2x128xf32, #tpu.memory_space<vmem>>, vector<2x128xf32>,
    return
  }
  func.func @transform_0(%arg0: i32) -> (i32, i32) {
    %c0_i32 = arith.constant 0 : i32
    %c0_i32_0 = arith.constant 0 : i32
    %c0_i32_1 = arith.constant 0 : i32
    return %c0_i32, %c0_i32_0 : i32, i32
  }
  func.func @transform_1(%arg0: i32) -> (i32, i32) {
    %c0_i32 = arith.constant 0 : i32
    %c0_i32_0 = arith.constant 0 : i32
    %c0_i32_1 = arith.constant 0 : i32
    return %c0_i32, %c0_i32_0 : i32, i32
  }
  func.func @transform_2(%arg0: i32) -> (i32, i32, i32) {
    %c0_i32 = arith.constant 0 : i32
    %c0_i32_0 = arith.constant 0 : i32
    %c0_i32_1 = arith.constant 0 : i32
    %c0_i32_2 = arith.constant 0 : i32
    return %c0_i32, %c0_i32_0, %c0_i32_1 : i32, i32, i32
  }
  func.func @transform_3(%arg0: i32) -> (i32, i32, i32) {
    %c0_i32 = arith.constant 0 : i32
    %c0_i32_0 = arith.constant 0 : i32
    %c0_i32_1 = arith.constant 0 : i32
    %c0_i32_2 = arith.constant 0 : i32
    return %c0_i32, %c0_i32_0, %c0_i32_1 : i32, i32, i32
  }
  func.func @transform_4(%arg0: i32) -> (i32, i32) {
    %c0_i32 = arith.constant 0 : i32
    %c0_i32_0 = arith.constant 0 : i32
    %c0_i32_1 = arith.constant 0 : i32
    return %c0_i32, %c0_i32_0 : i32, i32
  }
  func.func @transform_5(%arg0: i32) -> (i32, i32) {
    %c0_i32 = arith.constant 0 : i32
    %c0_i32_0 = arith.constant 0 : i32
    %c0_i32_1 = arith.constant 0 : i32
    return %c0_i32, %c0_i32_0 : i32, i32
  }
  func.func @transform_6(%arg0: i32) -> (i32, i32) {
    %c0_i32 = arith.constant 0 : i32
    %c0_i32_0 = arith.constant 0 : i32
    %c0_i32_1 = arith.constant 0 : i32
    return %c0_i32, %c0_i32_0 : i32, i32
  }
  func.func @transform_7(%arg0: i32) -> (i32, i32) {
    %c0_i32 = arith.constant 0 : i32
    %c0_i32_0 = arith.constant 0 : i32
    %c0_i32_1 = arith.constant 0 : i32
    return %c0_i32, %c0_i32_0 : i32, i32
  }
  func.func @transform_8(%arg0: i32) -> (i32, i32) {
    %c0_i32 = arith.constant 0 : i32
    %c0_i32_0 = arith.constant 0 : i32
    %c0_i32_1 = arith.constant 0 : i32
    return %c0_i32, %c0_i32_0 : i32, i32
  }
  func.func @transform_9(%arg0: i32) -> (i32, i32) {
    %c0_i32 = arith.constant 0 : i32
    %c0_i32_0 = arith.constant 0 : i32
    %c0_i32_1 = arith.constant 0 : i32
    return %c0_i32, %c0_i32_0 : i32, i32
  }
  func.func @transform_10(%arg0: i32) -> (i32, i32) {
    %c0_i32 = arith.constant 0 : i32
    %c0_i32_0 = arith.constant 0 : i32
    %c0_i32_1 = arith.constant 0 : i32
    return %c0_i32, %c0_i32_0 : i32, i32
  }
  func.func @transform_11(%arg0: i32) -> (i32, i32, i32) {
    %c0_i32 = arith.constant 0 : i32
    %c0_i32_0 = arith.constant 0 : i32
    %c0_i32_1 = arith.constant 0 : i32
    %c0_i32_2 = arith.constant 0 : i32
    return %c0_i32, %c0_i32_0, %c0_i32_1 : i32, i32, i32
  }
  func.func @transform_12(%arg0: i32) -> (i32, i32, i32) {
    %c0_i32 = arith.constant 0 : i32
    %c0_i32_0 = arith.constant 0 : i32
    %c0_i32_1 = arith.constant 0 : i32
    %c0_i32_2 = arith.constant 0 : i32
    return %c0_i32, %c0_i32_0, %c0_i32_1 : i32, i32, i32
  }
  func.func @transform_13(%arg0: i32) -> (i32, i32) {
    %c0_i32 = arith.constant 0 : i32
    %c0_i32_0 = arith.constant 0 : i32
    %c0_i32_1 = arith.constant 0 : i32
    return %c0_i32, %c0_i32_0 : i32, i32
  }
  func.func @transform_14(%arg0: i32) -> (i32, i32) {
    %c0_i32 = arith.constant 0 : i32
    %c0_i32_0 = arith.constant 0 : i32
    %c0_i32_1 = arith.constant 0 : i32
    return %c0_i32, %c0_i32_0 : i32, i32
  }
  func.func @transform_15(%arg0: i32) -> (i32, i32) {
    %c0_i32 = arith.constant 0 : i32
    %c0_i32_0 = arith.constant 0 : i32
    %c0_i32_1 = arith.constant 0 : i32
    return %c0_i32, %c0_i32_0 : i32, i32
  }
  func.func @transform_16(%arg0: i32) -> (i32, i32) {
    %c0_i32 = arith.constant 0 : i32
    %c0_i32_0 = arith.constant 0 : i32
    %c0_i32_1 = arith.constant 0 : i32
    return %c0_i32, %c0_i32_0 : i32, i32
  }
  func.func @transform_17(%arg0: i32) -> (i32, i32) {
    %c0_i32 = arith.constant 0 : i32
    %c0_i32_0 = arith.constant 0 : i32
    %c0_i32_1 = arith.constant 0 : i32
    return %c0_i32, %c0_i32_0 : i32, i32
  }
  func.func @transform_18(%arg0: i32) -> (i32, i32) {
    %c0_i32 = arith.constant 0 : i32
    %c0_i32_0 = arith.constant 0 : i32
    %c0_i32_1 = arith.constant 0 : i32
    return %c0_i32, %c0_i32_0 : i32, i32
  }
  func.func @transform_19(%arg0: i32) -> (i32, i32) {
    %c0_i32 = arith.constant 0 : i32
    %c0_i32_0 = arith.constant 0 : i32
    %c0_i32_1 = arith.constant 0 : i32
    return %c0_i32, %c0_i32_0 : i32, i32
  }
}

</mosaic_0001>

<llo_original>
// kernel: encoder_forward.1
$region0: #{encoder_forward.1}
  #allocation0 [shape = 'u32[]', space=smem, size = 0x4, offset = 0x4, fixed_abs, tag = 'smem constant byte address 0x4 - core index']
  #allocation1 [shape = 'u32[144,128]{1,0:T(1,128)}', space=vmem, size = 0x12000, scoped, tag = 'internal scratch']
  %s0 = inlined_call_operand.vmem [shape: f32[16,162], index: 0, kind: input, shape index: {}]
  %s1 = inlined_call_operand.vmem [shape: f32[2,4], index: 1, kind: input, shape index: {}]
  %s2 = inlined_call_operand.vmem [shape: f32[3,8,16], index: 2, kind: input, shape index: {}]
  %s3 = inlined_call_operand.vmem [shape: f32[4,2,8], index: 3, kind: input, shape index: {}]
  %s4 = inlined_call_operand.vmem [shape: f32[162,64], index: 4, kind: input, shape index: {}]
  %s5 = inlined_call_operand.vmem [shape: f32[1,64], index: 5, kind: input, shape index: {}]
  %s6 = inlined_call_operand.vmem [shape: f32[64,192], index: 6, kind: input, shape index: {}]
  %s7 = inlined_call_operand.vmem [shape: f32[1,64], index: 7, kind: input, shape index: {}]
  %s8 = inlined_call_operand.vmem [shape: f32[64,768], index: 8, kind: input, shape index: {}]
  %s9 = inlined_call_operand.vmem [shape: f32[4,192], index: 9, kind: input, shape index: {}]
  %s10 = inlined_call_operand.vmem [shape: f32[1,192], index: 10, kind: input, shape index: {}]
  %s11 = inlined_call_operand.vmem [shape: f32[1,192,192], index: 11, kind: input, shape index: {}]
  %s12 = inlined_call_operand.vmem [shape: f32[1,1,192], index: 12, kind: input, shape index: {}]
  %s13 = inlined_call_operand.vmem [shape: f32[192,168], index: 13, kind: input, shape index: {}]
  %s14 = inlined_call_operand.vmem [shape: f32[1,168], index: 14, kind: input, shape index: {}]
  %s15 = inlined_call_operand.vmem [shape: f32[32,128], index: 15, kind: input, shape index: {}]
  %s16 = inlined_call_operand.vmem [shape: f32[32,128], index: 16, kind: input, shape index: {}]
  %s17 = inlined_call_operand.vmem [shape: f32[128,128], index: 17, kind: input, shape index: {}]
  %s18 = inlined_call_operand.vmem [shape: f32[8,128], index: 18, kind: input, shape index: {}]
  %s19 = inlined_call_operand.vmem [shape: f32[2,128], index: 19, kind: output, shape index: {}]
  %s20 = sld [smem:[#allocation0]]
  $region86: #{encoder_forward.1} parent=0
    _
  %s22 = ssub.s32 1, %s20
  %s23 = scalar_select 0, %s22, %s20
  // Predicated region
  $region2: #{encoder_forward.1} parent=0 // pred_check
    _
  $region3: #{encoder_forward.1} parent=0 // pred_check_branch
    %25 = sbr.rel (0) target = $region5
  $region4: #{encoder_forward.1} parent=0 // pred_region
    _
  $region5: #{encoder_forward.1} parent=0 // pred_fallthru
    _
  // Predicated region
  $region6: #{encoder_forward.1} parent=0 // pred_check
    _
  $region7: #{encoder_forward.1} parent=0 // pred_check_branch
    %27 = sbr.rel (0) target = $region9
  $region8: #{encoder_forward.1} parent=0 // pred_region
    _
  $region9: #{encoder_forward.1} parent=0 // pred_fallthru
    _
  // Predicated region
  $region10: #{encoder_forward.1} parent=0 // pred_check
    _
  $region11: #{encoder_forward.1} parent=0 // pred_check_branch
    %29 = sbr.rel (0) target = $region13
  $region12: #{encoder_forward.1} parent=0 // pred_region
    _
  $region13: #{encoder_forward.1} parent=0 // pred_fallthru
    _
  // Predicated region
  $region14: #{encoder_forward.1} parent=0 // pred_check
    _
  $region15: #{encoder_forward.1} parent=0 // pred_check_branch
    %31 = sbr.rel (0) target = $region17
  $region16: #{encoder_forward.1} parent=0 // pred_region
    _
  $region17: #{encoder_forward.1} parent=0 // pred_fallthru
    _
  // Predicated region
  $region18: #{encoder_forward.1} parent=0 // pred_check
    _
  $region19: #{encoder_forward.1} parent=0 // pred_check_branch
    %33 = sbr.rel (0) target = $region21
  $region20: #{encoder_forward.1} parent=0 // pred_region
    _
  $region21: #{encoder_forward.1} parent=0 // pred_fallthru
    _
  // Predicated region
  $region22: #{encoder_forward.1} parent=0 // pred_check
    _
  $region23: #{encoder_forward.1} parent=0 // pred_check_branch
    %35 = sbr.rel (0) target = $region25
  $region24: #{encoder_forward.1} parent=0 // pred_region
    _
  $region25: #{encoder_forward.1} parent=0 // pred_fallthru
    _
  // Predicated region
  $region26: #{encoder_forward.1} parent=0 // pred_check
    _
  $region27: #{encoder_forward.1} parent=0 // pred_check_branch
    %37 = sbr.rel (0) target = $region29
  $region28: #{encoder_forward.1} parent=0 // pred_region
    _
  $region29: #{encoder_forward.1} parent=0 // pred_fallthru
    _
  // Predicated region
  $region30: #{encoder_forward.1} parent=0 // pred_check
    _
  $region31: #{encoder_forward.1} parent=0 // pred_check_branch
    %39 = sbr.rel (0) target = $region33
  $region32: #{encoder_forward.1} parent=0 // pred_region
    _
  $region33: #{encoder_forward.1} parent=0 // pred_fallthru
    _
  // Predicated region
  $region34: #{encoder_forward.1} parent=0 // pred_check
    _
  $region35: #{encoder_forward.1} parent=0 // pred_check_branch
    %41 = sbr.rel (0) target = $region37
  $region36: #{encoder_forward.1} parent=0 // pred_region
    _
  $region37: #{encoder_forward.1} parent=0 // pred_fallthru
    _
  // Predicated region
  $region38: #{encoder_forward.1} parent=0 // pred_check
    _
  $region39: #{encoder_forward.1} parent=0 // pred_check_branch
    %43 = sbr.rel (0) target = $region41
  $region40: #{encoder_forward.1} parent=0 // pred_region
    _
  $region41: #{encoder_forward.1} parent=0 // pred_fallthru
    _
  // Predicated region
  $region42: #{encoder_forward.1} parent=0 // pred_check
    _
  $region43: #{encoder_forward.1} parent=0 // pred_check_branch
    %45 = sbr.rel (0) target = $region45
  $region44: #{encoder_forward.1} parent=0 // pred_region
    _
  $region45: #{encoder_forward.1} parent=0 // pred_fallthru
    _
  // Predicated region
  $region46: #{encoder_forward.1} parent=0 // pred_check
    _
  $region47: #{encoder_forward.1} parent=0 // pred_check_branch
    %47 = sbr.rel (0) target = $region49
  $region48: #{encoder_forward.1} parent=0 // pred_region
    _
  $region49: #{encoder_forward.1} parent=0 // pred_fallthru
    _
  // Predicated region
  $region50: #{encoder_forward.1} parent=0 // pred_check
    _
  $region51: #{encoder_forward.1} parent=0 // pred_check_branch
    %49 = sbr.rel (0) target = $region53
  $region52: #{encoder_forward.1} parent=0 // pred_region
    _
  $region53: #{encoder_forward.1} parent=0 // pred_fallthru
    _
  // Predicated region
  $region54: #{encoder_forward.1} parent=0 // pred_check
    _
  $region55: #{encoder_forward.1} parent=0 // pred_check_branch
    %51 = sbr.rel (0) target = $region57
  $region56: #{encoder_forward.1} parent=0 // pred_region
    _
  $region57: #{encoder_forward.1} parent=0 // pred_fallthru
    _
  // Predicated region
  $region58: #{encoder_forward.1} parent=0 // pred_check
    _
  $region59: #{encoder_forward.1} parent=0 // pred_check_branch
    %53 = sbr.rel (0) target = $region61
  $region60: #{encoder_forward.1} parent=0 // pred_region
    _
  $region61: #{encoder_forward.1} parent=0 // pred_fallthru
    _
  // Predicated region
  $region62: #{encoder_forward.1} parent=0 // pred_check
    _
  $region63: #{encoder_forward.1} parent=0 // pred_check_branch
    %55 = sbr.rel (0) target = $region65
  $region64: #{encoder_forward.1} parent=0 // pred_region
    _
  $region65: #{encoder_forward.1} parent=0 // pred_fallthru
    _
  // Predicated region
  $region66: #{encoder_forward.1} parent=0 // pred_check
    _
  $region67: #{encoder_forward.1} parent=0 // pred_check_branch
    %57 = sbr.rel (0) target = $region69
  $region68: #{encoder_forward.1} parent=0 // pred_region
    _
  $region69: #{encoder_forward.1} parent=0 // pred_fallthru
    _
  // Predicated region
  $region70: #{encoder_forward.1} parent=0 // pred_check
    _
  $region71: #{encoder_forward.1} parent=0 // pred_check_branch
    %59 = sbr.rel (0) target = $region73
  $region72: #{encoder_forward.1} parent=0 // pred_region
    _
  $region73: #{encoder_forward.1} parent=0 // pred_fallthru
    _
  // Predicated region
  $region74: #{encoder_forward.1} parent=0 // pred_check
    _
  $region75: #{encoder_forward.1} parent=0 // pred_check_branch
    %61 = sbr.rel (0) target = $region77
  $region76: #{encoder_forward.1} parent=0 // pred_region
    _
  $region77: #{encoder_forward.1} parent=0 // pred_fallthru
    _
  %v62 = vld [vmem:[%s0] sm:$0xff]
  %v63 = vld [vmem:[%s0 + $0x8] sm:$0xff]
  %v64 = vld [vmem:[%s0 + $0x10] sm:$0xff]
  %v65 = vld [vmem:[%s0 + $0x18] sm:$0xff]
  %v66 = vld [vmem:[%s4] sm:$0xff]
  %v67 = vld [vmem:[%s4 + $0x8] sm:$0xff]
  %v68 = vld [vmem:[%s4 + $0x10] sm:$0xff]
  %v69 = vld [vmem:[%s4 + $0x18] sm:$0xff]
  %v70 = vld [vmem:[%s4 + $0x20] sm:$0xff]
  %v71 = vld [vmem:[%s4 + $0x28] sm:$0xff]
  %v72 = vld [vmem:[%s4 + $0x30] sm:$0xff]
  %v73 = vld [vmem:[%s4 + $0x38] sm:$0xff]
  %v74 = vld [vmem:[%s4 + $0x40] sm:$0xff]
  %v75 = vld [vmem:[%s4 + $0x48] sm:$0xff]
  %v76 = vld [vmem:[%s4 + $0x50] sm:$0xff]
  %v77 = vld [vmem:[%s4 + $0x58] sm:$0xff]
  %v78 = vld [vmem:[%s4 + $0x60] sm:$0xff]
  %v79 = vld [vmem:[%s4 + $0x68] sm:$0xff]
  %v80 = vld [vmem:[%s4 + $0x70] sm:$0xff]
  %v81 = vld [vmem:[%s4 + $0x78] sm:$0xff]
  %v82 = vld [vmem:[%s4 + $0x80] sm:$0xff]
  %v83 = vld [vmem:[%s4 + $0x88] sm:$0xff]
  %v84 = vld [vmem:[%s4 + $0x90] sm:$0xff]
  %v85 = vld [vmem:[%s4 + $0x98] sm:$0xff]
  %v86 = vld [vmem:[%s4 + $0xa0] sm:$0x3]
  %v87 = vld [vmem:[%s5] sm:$0x1]
  %v89 = vlaneseq
  %v90 = vshrl.u32 %v89, 7
  %v91 = vsub.s32 0, %v90
  %v92 = vrot.slane %v87, %v91
  %vm94 = vcmask 277504
  %v96 = vsel %vm94, %v63, 0
  %v99 = vsel %vm94, %v65, 0
  %vm101 = vcmask 1041408
  %v103 = vsel %vm101, %v86, 0
  %105 = vmatprep.subr.mxu0 0.0
  %106 = vmatpush1.msra.mxu0 %v66
  %107 = vmatprep.subr.mxu0 0.0
  %108 = vmatpush1.msra.mxu0 %v67
  %109 = vmatprep.subr.mxu0 0.0
  %110 = vmatpush1.msra.mxu0 %v68
  %111 = vmatprep.subr.mxu0 0.0
  %112 = vmatpush1.msra.mxu0 %v69
  %113 = vmatprep.subr.mxu0 0.0
  %114 = vmatpush1.msra.mxu0 %v70
  %115 = vmatprep.subr.mxu0 0.0
  %116 = vmatpush1.msra.mxu0 %v71
  %117 = vmatprep.subr.mxu0 0.0
  %118 = vmatpush1.msra.mxu0 %v72
  %119 = vmatprep.subr.mxu0 0.0
  %120 = vmatpush1.msra.mxu0 %v73
  %121 = vmatprep.subr.mxu0 0.0
  %122 = vmatpush1.msra.mxu0 %v74
  %123 = vmatprep.subr.mxu0 0.0
  %124 = vmatpush1.msra.mxu0 %v75
  %125 = vmatprep.subr.mxu0 0.0
  %126 = vmatpush1.msra.mxu0 %v76
  %127 = vmatprep.subr.mxu0 0.0
  %128 = vmatpush1.msra.mxu0 %v77
  %129 = vmatprep.subr.mxu0 0.0
  %130 = vmatpush1.msra.mxu0 %v78
  %131 = vmatprep.subr.mxu0 0.0
  %132 = vmatpush1.msra.mxu0 %v79
  %133 = vmatprep.subr.mxu0 0.0
  %134 = vmatpush1.msra.mxu0 %v80
  %135 = vmatprep.subr.mxu0 0.0
  %136 = vmatpush1.msra.mxu0 %v81
  %137 = vmatprep.subr.mxu0 0.0
  %138 = vmatpush1.msra.mxu0 %v82
  %139 = vmatprep.subr.mxu0 0.0
  %140 = vmatpush1.msra.mxu0 %v83
  %141 = vmatprep.subr.mxu0 0.0
  %142 = vmatpush1.msra.mxu0 %v84
  %143 = vmatprep.subr.mxu0 0.0
  %144 = vmatpush1.msra.mxu0 %v85
  %145 = vmatprep.subr.mxu0 0.0
  %146 = vmatpush1.msra.mxu0 %v103
  %147 = vmatprep.subr.mxu0 0.0
  %148 = vmatpush1.msra.mxu0 0.0
  %149 = vmatprep.subr.mxu0 0.0
  %150 = vmatpush1.msra.mxu0 0.0
  %151 = vmatprep.subr.mxu0 0.0
  %152 = vmatpush1.msra.mxu0 0.0
  %153 = vmatprep.subr.mxu0 0.0
  %154 = vmatpush1.msra.mxu0 0.0
  %155 = vmatprep.subr.mxu0 0.0
  %156 = vmatpush1.msra.mxu0 0.0
  %157 = vmatprep.subr.mxu0 0.0
  %158 = vmatpush1.msra.mxu0 0.0
  %159 = vmatprep.subr.mxu0 0.0
  %160 = vmatpush1.msra.mxu0 0.0
  %161 = vmatprep.subr.mxu0 0.0
  %162 = vmatpush1.msra.mxu0 0.0
  %163 = vmatprep.subr.mxu0 0.0
  %164 = vmatpush1.msra.mxu0 0.0
  %165 = vmatprep.subr.mxu0 0.0
  %166 = vmatpush1.msra.mxu0 0.0
  %167 = vmatprep.subr.mxu0 0.0
  %168 = vmatpush1.msra.mxu0 0.0
  %169 = vmatprep.mubr.f32.mxu0 %v96
  %170 = vmatmul.mubr.f32.gmra.mrb[0].mxu0 %v62
  %v171 = vpop.f32.mrb[0].mxu0
  %v172 = vadd.f32 %v92, %v171
  %v173 = vpop.f32.mrb[0].mxu0
  %174 = vmatprep.mubr.f32.mxu0 %v99
  %175 = vmatmul.mubr.f32.gmra.mrb[0].mxu0 %v64
  %v176 = vpop.f32.mrb[0].mxu0
  %v177 = vadd.f32 %v92, %v176
  %v178 = vpop.f32.mrb[0].mxu0
  %179 = vdwg.mxu0
  %v180 = vmax.f32 %v172, 0.0
  %v181 = vmax.f32 %v177, 0.0
  %v182 = vld [vmem:[%s6] sm:$0xff]
  %v183 = vld [vmem:[%s6 + $0x8] sm:$0xff]
  %v184 = vld [vmem:[%s6 + $0x10] sm:$0xff]
  %v185 = vld [vmem:[%s6 + $0x18] sm:$0xff]
  %v186 = vld [vmem:[%s6 + $0x20] sm:$0xff]
  %v187 = vld [vmem:[%s6 + $0x28] sm:$0xff]
  %v188 = vld [vmem:[%s6 + $0x30] sm:$0xff]
  %v189 = vld [vmem:[%s6 + $0x38] sm:$0xff]
  %v190 = vld [vmem:[%s6 + $0x40] sm:$0xff]
  %v191 = vld [vmem:[%s6 + $0x48] sm:$0xff]
  %v192 = vld [vmem:[%s6 + $0x50] sm:$0xff]
  %v193 = vld [vmem:[%s6 + $0x58] sm:$0xff]
  %v194 = vld [vmem:[%s6 + $0x60] sm:$0xff]
  %v195 = vld [vmem:[%s6 + $0x68] sm:$0xff]
  %v196 = vld [vmem:[%s6 + $0x70] sm:$0xff]
  %v197 = vld [vmem:[%s6 + $0x78] sm:$0xff]
  %vm198 = vcmask 523264
  %v200 = vsel %vm198, %v180, 0
  %v203 = vsel %vm198, %v181, 0
  %205 = vmatprep.subr.mxu0 %v183
  %206 = vmatpush1.msra.mxu0 %v182
  %207 = vmatprep.subr.mxu0 %v185
  %208 = vmatpush1.msra.mxu0 %v184
  %209 = vmatprep.subr.mxu0 %v187
  %210 = vmatpush1.msra.mxu0 %v186
  %211 = vmatprep.subr.mxu0 %v189
  %212 = vmatpush1.msra.mxu0 %v188
  %213 = vmatprep.subr.mxu0 %v191
  %214 = vmatpush1.msra.mxu0 %v190
  %215 = vmatprep.subr.mxu0 %v193
  %216 = vmatpush1.msra.mxu0 %v192
  %217 = vmatprep.subr.mxu0 %v195
  %218 = vmatpush1.msra.mxu0 %v194
  %219 = vmatprep.subr.mxu0 %v197
  %220 = vmatpush1.msra.mxu0 %v196
  %221 = vmatprep.subr.mxu0 0.0
  %222 = vmatpush1.msra.mxu0 0.0
  %223 = vmatprep.subr.mxu0 0.0
  %224 = vmatpush1.msra.mxu0 0.0
  %225 = vmatprep.subr.mxu0 0.0
  %226 = vmatpush1.msra.mxu0 0.0
  %227 = vmatprep.subr.mxu0 0.0
  %228 = vmatpush1.msra.mxu0 0.0
  %229 = vmatprep.subr.mxu0 0.0
  %230 = vmatpush1.msra.mxu0 0.0
  %231 = vmatprep.subr.mxu0 0.0
  %232 = vmatpush1.msra.mxu0 0.0
  %233 = vmatprep.subr.mxu0 0.0
  %234 = vmatpush1.msra.mxu0 0.0
  %235 = vmatprep.subr.mxu0 0.0
  %236 = vmatpush1.msra.mxu0 0.0
  %237 = vmatprep.subr.mxu0 0.0
  %238 = vmatpush1.msra.mxu0 0.0
  %239 = vmatprep.subr.mxu0 0.0
  %240 = vmatpush1.msra.mxu0 0.0
  %241 = vmatprep.subr.mxu0 0.0
  %242 = vmatpush1.msra.mxu0 0.0
  %243 = vmatprep.subr.mxu0 0.0
  %244 = vmatpush1.msra.mxu0 0.0
  %245 = vmatprep.subr.mxu0 0.0
  %246 = vmatpush1.msra.mxu0 0.0
  %247 = vmatprep.subr.mxu0 0.0
  %248 = vmatpush1.msra.mxu0 0.0
  %249 = vmatprep.subr.mxu0 0.0
  %250 = vmatpush1.msra.mxu0 0.0
  %251 = vmatprep.subr.mxu0 0.0
  %252 = vmatpush1.msra.mxu0 0.0
  %253 = vmatprep.subr.mxu0 0.0
  %254 = vmatpush1.msra.mxu0 0.0
  %255 = vmatprep.subr.mxu0 0.0
  %256 = vmatpush1.msra.mxu0 0.0
  %257 = vmatprep.subr.mxu0 0.0
  %258 = vmatpush1.msra.mxu0 0.0
  %259 = vmatprep.subr.mxu0 0.0
  %260 = vmatpush1.msra.mxu0 0.0
  %261 = vmatprep.subr.mxu0 0.0
  %262 = vmatpush1.msra.mxu0 0.0
  %263 = vmatprep.subr.mxu0 0.0
  %264 = vmatpush1.msra.mxu0 0.0
  %265 = vmatprep.subr.mxu0 0.0
  %266 = vmatpush1.msra.mxu0 0.0
  %267 = vmatprep.subr.mxu0 0.0
  %268 = vmatpush1.msra.mxu0 0.0
  %269 = vmatprep.mubr.f32.mxu0 0.0
  %270 = vmatmul.mubr.f32.gmra.mrb[0].mxu0 %v200
  %v271 = vpop.f32.mrb[0].mxu0
  %v272 = vadd.f32 0.0, %v271
  %v273 = vpop.f32.mrb[0].mxu0
  %v274 = vadd.f32 0.0, %v273
  %275 = vmatprep.mubr.f32.mxu0 0.0
  %276 = vmatmul.mubr.f32.gmra.mrb[0].mxu0 %v203
  %v277 = vpop.f32.mrb[0].mxu0
  %v278 = vadd.f32 0.0, %v277
  %v279 = vpop.f32.mrb[0].mxu0
  %v280 = vadd.f32 0.0, %v279
  %281 = vdwg.mxu0
  %v282 = vld [vmem:[%s2] sm:$0xff]
  %s283 = scalar_lea.vmem %s2, 8
  %v284 = vld [vmem:[%s283] sm:$0xff]
  %287 = vrot.lane.b32.xlu0 %v272, 64
  %v288 = vpop.permute.xlu0 %287
  %289 = vrot.lane.b32.xlu0 %v278, 64
  %v290 = vpop.permute.xlu0 %289
  %vm293 = vcmask 130048
  %v295 = vsel %vm293, %v284, 0
  %297 = vmatprep.subr.mxu0 0.0
  %298 = vmatpush1.msra.mxu0 %v288
  %299 = vmatprep.subr.mxu0 0.0
  %300 = vmatpush1.msra.mxu0 %v290
  %301 = vmatprep.subr.mxu0 0.0
  %302 = vmatpush1.msra.mxu0 0.0
  %303 = vmatprep.subr.mxu0 0.0
  %304 = vmatpush1.msra.mxu0 0.0
  %305 = vmatprep.subr.mxu0 0.0
  %306 = vmatpush1.msra.mxu0 0.0
  %307 = vmatprep.subr.mxu0 0.0
  %308 = vmatpush1.msra.mxu0 0.0
  %309 = vmatprep.subr.mxu0 0.0
  %310 = vmatpush1.msra.mxu0 0.0
  %311 = vmatprep.subr.mxu0 0.0
  %312 = vmatpush1.msra.mxu0 0.0
  %313 = vmatprep.subr.mxu0 0.0
  %314 = vmatpush1.msra.mxu0 0.0
  %315 = vmatprep.subr.mxu0 0.0
  %316 = vmatpush1.msra.mxu0 0.0
  %317 = vmatprep.subr.mxu0 0.0
  %318 = vmatpush1.msra.mxu0 0.0
  %319 = vmatprep.subr.mxu0 0.0
  %320 = vmatpush1.msra.mxu0 0.0
  %321 = vmatprep.subr.mxu0 0.0
  %322 = vmatpush1.msra.mxu0 0.0
  %323 = vmatprep.subr.mxu0 0.0
  %324 = vmatpush1.msra.mxu0 0.0
  %325 = vmatprep.subr.mxu0 0.0
  %326 = vmatpush1.msra.mxu0 0.0
  %327 = vmatprep.subr.mxu0 0.0
  %328 = vmatpush1.msra.mxu0 0.0
  %329 = vmatprep.subr.mxu0 0.0
  %330 = vmatpush1.msra.mxu0 0.0
  %331 = vmatprep.subr.mxu0 0.0
  %332 = vmatpush1.msra.mxu0 0.0
  %333 = vmatprep.subr.mxu0 0.0
  %334 = vmatpush1.msra.mxu0 0.0
  %335 = vmatprep.subr.mxu0 0.0
  %336 = vmatpush1.msra.mxu0 0.0
  %337 = vmatprep.subr.mxu0 0.0
  %338 = vmatpush1.msra.mxu0 0.0
  %339 = vmatprep.subr.mxu0 0.0
  %340 = vmatpush1.msra.mxu0 0.0
  %341 = vmatprep.subr.mxu0 0.0
  %342 = vmatpush1.msra.mxu0 0.0
  %343 = vmatprep.subr.mxu0 0.0
  %344 = vmatpush1.msra.mxu0 0.0
  %345 = vmatprep.subr.mxu0 0.0
  %346 = vmatpush1.msra.mxu0 0.0
  %347 = vmatprep.subr.mxu0 0.0
  %348 = vmatpush1.msra.mxu0 0.0
  %349 = vmatprep.subr.mxu0 0.0
  %350 = vmatpush1.msra.mxu0 0.0
  %351 = vmatprep.subr.mxu0 0.0
  %352 = vmatpush1.msra.mxu0 0.0
  %353 = vmatprep.subr.mxu0 0.0
  %354 = vmatpush1.msra.mxu0 0.0
  %355 = vmatprep.subr.mxu0 0.0
  %356 = vmatpush1.msra.mxu0 0.0
  %357 = vmatprep.subr.mxu0 0.0
  %358 = vmatpush1.msra.mxu0 0.0
  %359 = vmatprep.subr.mxu0 0.0
  %360 = vmatpush1.msra.mxu0 0.0
  %361 = vmatprep.mubr.f32.mxu0 0.0
  %362 = vmatmul.mubr.f32.gmra.mrb[0].mxu0 %v295
  %v363 = vpop.f32.mrb[0].mxu0
  %v364 = vadd.f32 0.0, %v363
  %v365 = vpop.f32.mrb[0].mxu0
  %366 = vdwg.mxu0
  %v368 = vsel %vm293, %v282, 0
  %370 = vmatprep.subr.mxu0 0.0
  %371 = vmatpush1.msra.mxu0 %v272
  %372 = vmatprep.subr.mxu0 0.0
  %373 = vmatpush1.msra.mxu0 %v278
  %374 = vmatprep.subr.mxu0 0.0
  %375 = vmatpush1.msra.mxu0 0.0
  %376 = vmatprep.subr.mxu0 0.0
  %377 = vmatpush1.msra.mxu0 0.0
  %378 = vmatprep.subr.mxu0 0.0
  %379 = vmatpush1.msra.mxu0 0.0
  %380 = vmatprep.subr.mxu0 0.0
  %381 = vmatpush1.msra.mxu0 0.0
  %382 = vmatprep.subr.mxu0 0.0
  %383 = vmatpush1.msra.mxu0 0.0
  %384 = vmatprep.subr.mxu0 0.0
  %385 = vmatpush1.msra.mxu0 0.0
  %386 = vmatprep.subr.mxu0 0.0
  %387 = vmatpush1.msra.mxu0 0.0
  %388 = vmatprep.subr.mxu0 0.0
  %389 = vmatpush1.msra.mxu0 0.0
  %390 = vmatprep.subr.mxu0 0.0
  %391 = vmatpush1.msra.mxu0 0.0
  %392 = vmatprep.subr.mxu0 0.0
  %393 = vmatpush1.msra.mxu0 0.0
  %394 = vmatprep.subr.mxu0 0.0
  %395 = vmatpush1.msra.mxu0 0.0
  %396 = vmatprep.subr.mxu0 0.0
  %397 = vmatpush1.msra.mxu0 0.0
  %398 = vmatprep.subr.mxu0 0.0
  %399 = vmatpush1.msra.mxu0 0.0
  %400 = vmatprep.subr.mxu0 0.0
  %401 = vmatpush1.msra.mxu0 0.0
  %402 = vmatprep.subr.mxu0 0.0
  %403 = vmatpush1.msra.mxu0 0.0
  %404 = vmatprep.subr.mxu0 0.0
  %405 = vmatpush1.msra.mxu0 0.0
  %406 = vmatprep.subr.mxu0 0.0
  %407 = vmatpush1.msra.mxu0 0.0
  %408 = vmatprep.subr.mxu0 0.0
  %409 = vmatpush1.msra.mxu0 0.0
  %410 = vmatprep.subr.mxu0 0.0
  %411 = vmatpush1.msra.mxu0 0.0
  %412 = vmatprep.subr.mxu0 0.0
  %413 = vmatpush1.msra.mxu0 0.0
  %414 = vmatprep.subr.mxu0 0.0
  %415 = vmatpush1.msra.mxu0 0.0
  %416 = vmatprep.subr.mxu0 0.0
  %417 = vmatpush1.msra.mxu0 0.0
  %418 = vmatprep.subr.mxu0 0.0
  %419 = vmatpush1.msra.mxu0 0.0
  %420 = vmatprep.subr.mxu0 0.0
  %421 = vmatpush1.msra.mxu0 0.0
  %422 = vmatprep.subr.mxu0 0.0
  %423 = vmatpush1.msra.mxu0 0.0
  %424 = vmatprep.subr.mxu0 0.0
  %425 = vmatpush1.msra.mxu0 0.0
  %426 = vmatprep.subr.mxu0 0.0
  %427 = vmatpush1.msra.mxu0 0.0
  %428 = vmatprep.subr.mxu0 0.0
  %429 = vmatpush1.msra.mxu0 0.0
  %430 = vmatprep.subr.mxu0 0.0
  %431 = vmatpush1.msra.mxu0 0.0
  %432 = vmatprep.subr.mxu0 0.0
  %433 = vmatpush1.msra.mxu0 0.0
  %434 = vmatprep.mubr.f32.mxu0 0.0
  %435 = vmatmul.mubr.f32.gmra.mrb[0].mxu0 %v368
  %v436 = vpop.f32.mrb[0].mxu0
  %v437 = vadd.f32 %v364, %v436
  %v438 = vpop.f32.mrb[0].mxu0
  %439 = vdwg.mxu0
  %s440 = scalar_lea.vmem %s2, 16
  %v441 = vld [vmem:[%s440] sm:$0xff]
  %v443 = vsel %vm293, %v441, 0
  %445 = vmatprep.subr.mxu0 0.0
  %446 = vmatpush1.msra.mxu0 %v274
  %447 = vmatprep.subr.mxu0 0.0
  %448 = vmatpush1.msra.mxu0 %v280
  %449 = vmatprep.subr.mxu0 0.0
  %450 = vmatpush1.msra.mxu0 0.0
  %451 = vmatprep.subr.mxu0 0.0
  %452 = vmatpush1.msra.mxu0 0.0
  %453 = vmatprep.subr.mxu0 0.0
  %454 = vmatpush1.msra.mxu0 0.0
  %455 = vmatprep.subr.mxu0 0.0
  %456 = vmatpush1.msra.mxu0 0.0
  %457 = vmatprep.subr.mxu0 0.0
  %458 = vmatpush1.msra.mxu0 0.0
  %459 = vmatprep.subr.mxu0 0.0
  %460 = vmatpush1.msra.mxu0 0.0
  %461 = vmatprep.subr.mxu0 0.0
  %462 = vmatpush1.msra.mxu0 0.0
  %463 = vmatprep.subr.mxu0 0.0
  %464 = vmatpush1.msra.mxu0 0.0
  %465 = vmatprep.subr.mxu0 0.0
  %466 = vmatpush1.msra.mxu0 0.0
  %467 = vmatprep.subr.mxu0 0.0
  %468 = vmatpush1.msra.mxu0 0.0
  %469 = vmatprep.subr.mxu0 0.0
  %470 = vmatpush1.msra.mxu0 0.0
  %471 = vmatprep.subr.mxu0 0.0
  %472 = vmatpush1.msra.mxu0 0.0
  %473 = vmatprep.subr.mxu0 0.0
  %474 = vmatpush1.msra.mxu0 0.0
  %475 = vmatprep.subr.mxu0 0.0
  %476 = vmatpush1.msra.mxu0 0.0
  %477 = vmatprep.subr.mxu0 0.0
  %478 = vmatpush1.msra.mxu0 0.0
  %479 = vmatprep.subr.mxu0 0.0
  %480 = vmatpush1.msra.mxu0 0.0
  %481 = vmatprep.subr.mxu0 0.0
  %482 = vmatpush1.msra.mxu0 0.0
  %483 = vmatprep.subr.mxu0 0.0
  %484 = vmatpush1.msra.mxu0 0.0
  %485 = vmatprep.subr.mxu0 0.0
  %486 = vmatpush1.msra.mxu0 0.0
  %487 = vmatprep.subr.mxu0 0.0
  %488 = vmatpush1.msra.mxu0 0.0
  %489 = vmatprep.subr.mxu0 0.0
  %490 = vmatpush1.msra.mxu0 0.0
  %491 = vmatprep.subr.mxu0 0.0
  %492 = vmatpush1.msra.mxu0 0.0
  %493 = vmatprep.subr.mxu0 0.0
  %494 = vmatpush1.msra.mxu0 0.0
  %495 = vmatprep.subr.mxu0 0.0
  %496 = vmatpush1.msra.mxu0 0.0
  %497 = vmatprep.subr.mxu0 0.0
  %498 = vmatpush1.msra.mxu0 0.0
  %499 = vmatprep.subr.mxu0 0.0
  %500 = vmatpush1.msra.mxu0 0.0
  %501 = vmatprep.subr.mxu0 0.0
  %502 = vmatpush1.msra.mxu0 0.0
  %503 = vmatprep.subr.mxu0 0.0
  %504 = vmatpush1.msra.mxu0 0.0
  %505 = vmatprep.subr.mxu0 0.0
  %506 = vmatpush1.msra.mxu0 0.0
  %507 = vmatprep.subr.mxu0 0.0
  %508 = vmatpush1.msra.mxu0 0.0
  %509 = vmatprep.mubr.f32.mxu0 0.0
  %510 = vmatmul.mubr.f32.gmra.mrb[0].mxu0 %v443
  %v511 = vpop.f32.mrb[0].mxu0
  %v512 = vadd.f32 0.0, %v511
  %v513 = vpop.f32.mrb[0].mxu0
  %514 = vdwg.mxu0
  %v515 = vadd.f32 %v437, %v512
  %v516 = vld [vmem:[%s7] sm:$0x1]
  %v518 = vlaneseq
  %v519 = vshrl.u32 %v518, 7
  %v520 = vsub.s32 0, %v519
  %v521 = vrot.slane %v516, %v520
  %v523 = vadd.f32 %v515, %v521
  %v524 = vmax.f32 %v523, 0.0
  %v525 = vld [vmem:[%s8] sm:$0xff]
  %v526 = vld [vmem:[%s8 + $0x8] sm:$0xff]
  %v527 = vld [vmem:[%s8 + $0x10] sm:$0xff]
  %v528 = vld [vmem:[%s8 + $0x18] sm:$0xff]
  %v529 = vld [vmem:[%s8 + $0x20] sm:$0xff]
  %v530 = vld [vmem:[%s8 + $0x28] sm:$0xff]
  %v531 = vld [vmem:[%s8 + $0x30] sm:$0xff]
  %v532 = vld [vmem:[%s8 + $0x38] sm:$0xff]
  %v533 = vld [vmem:[%s8 + $0x40] sm:$0xff]
  %v534 = vld [vmem:[%s8 + $0x48] sm:$0xff]
  %v535 = vld [vmem:[%s8 + $0x50] sm:$0xff]
  %v536 = vld [vmem:[%s8 + $0x58] sm:$0xff]
  %v537 = vld [vmem:[%s8 + $0x60] sm:$0xff]
  %v538 = vld [vmem:[%s8 + $0x68] sm:$0xff]
  %v539 = vld [vmem:[%s8 + $0x70] sm:$0xff]
  %v540 = vld [vmem:[%s8 + $0x78] sm:$0xff]
  %v541 = vld [vmem:[%s8 + $0x80] sm:$0xff]
  %v542 = vld [vmem:[%s8 + $0x88] sm:$0xff]
  %v543 = vld [vmem:[%s8 + $0x90] sm:$0xff]
  %v544 = vld [vmem:[%s8 + $0x98] sm:$0xff]
  %v545 = vld [vmem:[%s8 + $0xa0] sm:$0xff]
  %v546 = vld [vmem:[%s8 + $0xa8] sm:$0xff]
  %v547 = vld [vmem:[%s8 + $0xb0] sm:$0xff]
  %v548 = vld [vmem:[%s8 + $0xb8] sm:$0xff]
  %v549 = vld [vmem:[%s8 + $0xc0] sm:$0xff]
  %v550 = vld [vmem:[%s8 + $0xc8] sm:$0xff]
  %v551 = vld [vmem:[%s8 + $0xd0] sm:$0xff]
  %v552 = vld [vmem:[%s8 + $0xd8] sm:$0xff]
  %v553 = vld [vmem:[%s8 + $0xe0] sm:$0xff]
  %v554 = vld [vmem:[%s8 + $0xe8] sm:$0xff]
  %v555 = vld [vmem:[%s8 + $0xf0] sm:$0xff]
  %v556 = vld [vmem:[%s8 + $0xf8] sm:$0xff]
  %v557 = vld [vmem:[%s8 + $0x100] sm:$0xff]
  %v558 = vld [vmem:[%s8 + $0x108] sm:$0xff]
  %v559 = vld [vmem:[%s8 + $0x110] sm:$0xff]
  %v560 = vld [vmem:[%s8 + $0x118] sm:$0xff]
  %v561 = vld [vmem:[%s8 + $0x120] sm:$0xff]
  %v562 = vld [vmem:[%s8 + $0x128] sm:$0xff]
  %v563 = vld [vmem:[%s8 + $0x130] sm:$0xff]
  %v564 = vld [vmem:[%s8 + $0x138] sm:$0xff]
  %v565 = vld [vmem:[%s8 + $0x140] sm:$0xff]
  %v566 = vld [vmem:[%s8 + $0x148] sm:$0xff]
  %v567 = vld [vmem:[%s8 + $0x150] sm:$0xff]
  %v568 = vld [vmem:[%s8 + $0x158] sm:$0xff]
  %v569 = vld [vmem:[%s8 + $0x160] sm:$0xff]
  %v570 = vld [vmem:[%s8 + $0x168] sm:$0xff]
  %v571 = vld [vmem:[%s8 + $0x170] sm:$0xff]
  %v572 = vld [vmem:[%s8 + $0x178] sm:$0xff]
  %v574 = vsel %vm198, %v524, 0
  %576 = vmatprep.subr.mxu0 %v526
  %577 = vmatpush1.msra.mxu0 %v525
  %578 = vmatprep.subr.mxu0 %v532
  %579 = vmatpush1.msra.mxu0 %v531
  %580 = vmatprep.subr.mxu0 %v538
  %581 = vmatpush1.msra.mxu0 %v537
  %582 = vmatprep.subr.mxu0 %v544
  %583 = vmatpush1.msra.mxu0 %v543
  %584 = vmatprep.subr.mxu0 %v550
  %585 = vmatpush1.msra.mxu0 %v549
  %586 = vmatprep.subr.mxu0 %v556
  %587 = vmatpush1.msra.mxu0 %v555
  %588 = vmatprep.subr.mxu0 %v562
  %589 = vmatpush1.msra.mxu0 %v561
  %590 = vmatprep.subr.mxu0 %v568
  %591 = vmatpush1.msra.mxu0 %v567
  %592 = vmatprep.subr.mxu0 0.0
  %593 = vmatpush1.msra.mxu0 0.0
  %594 = vmatprep.subr.mxu0 0.0
  %595 = vmatpush1.msra.mxu0 0.0
  %596 = vmatprep.subr.mxu0 0.0
  %597 = vmatpush1.msra.mxu0 0.0
  %598 = vmatprep.subr.mxu0 0.0
  %599 = vmatpush1.msra.mxu0 0.0
  %600 = vmatprep.subr.mxu0 0.0
  %601 = vmatpush1.msra.mxu0 0.0
  %602 = vmatprep.subr.mxu0 0.0
  %603 = vmatpush1.msra.mxu0 0.0
  %604 = vmatprep.subr.mxu0 0.0
  %605 = vmatpush1.msra.mxu0 0.0
  %606 = vmatprep.subr.mxu0 0.0
  %607 = vmatpush1.msra.mxu0 0.0
  %608 = vmatprep.subr.mxu0 0.0
  %609 = vmatpush1.msra.mxu0 0.0
  %610 = vmatprep.subr.mxu0 0.0
  %611 = vmatpush1.msra.mxu0 0.0
  %612 = vmatprep.subr.mxu0 0.0
  %613 = vmatpush1.msra.mxu0 0.0
  %614 = vmatprep.subr.mxu0 0.0
  %615 = vmatpush1.msra.mxu0 0.0
  %616 = vmatprep.subr.mxu0 0.0
  %617 = vmatpush1.msra.mxu0 0.0
  %618 = vmatprep.subr.mxu0 0.0
  %619 = vmatpush1.msra.mxu0 0.0
  %620 = vmatprep.subr.mxu0 0.0
  %621 = vmatpush1.msra.mxu0 0.0
  %622 = vmatprep.subr.mxu0 0.0
  %623 = vmatpush1.msra.mxu0 0.0
  %624 = vmatprep.subr.mxu0 0.0
  %625 = vmatpush1.msra.mxu0 0.0
  %626 = vmatprep.subr.mxu0 0.0
  %627 = vmatpush1.msra.mxu0 0.0
  %628 = vmatprep.subr.mxu0 0.0
  %629 = vmatpush1.msra.mxu0 0.0
  %630 = vmatprep.subr.mxu0 0.0
  %631 = vmatpush1.msra.mxu0 0.0
  %632 = vmatprep.subr.mxu0 0.0
  %633 = vmatpush1.msra.mxu0 0.0
  %634 = vmatprep.subr.mxu0 0.0
  %635 = vmatpush1.msra.mxu0 0.0
  %636 = vmatprep.subr.mxu0 0.0
  %637 = vmatpush1.msra.mxu0 0.0
  %638 = vmatprep.subr.mxu0 0.0
  %639 = vmatpush1.msra.mxu0 0.0
  %640 = vmatprep.mubr.f32.mxu0 0.0
  %641 = vmatmul.mubr.f32.gmra.mrb[0].mxu0 %v574
  %v642 = vpop.f32.mrb[0].mxu0
  %v643 = vadd.f32 0.0, %v642
  %v644 = vpop.f32.mrb[0].mxu0
  %v645 = vadd.f32 0.0, %v644
  %646 = vdwg.mxu0
  %647 = vmatprep.subr.mxu0 %v528
  %648 = vmatpush1.msra.mxu0 %v527
  %649 = vmatprep.subr.mxu0 %v534
  %650 = vmatpush1.msra.mxu0 %v533
  %651 = vmatprep.subr.mxu0 %v540
  %652 = vmatpush1.msra.mxu0 %v539
  %653 = vmatprep.subr.mxu0 %v546
  %654 = vmatpush1.msra.mxu0 %v545
  %655 = vmatprep.subr.mxu0 %v552
  %656 = vmatpush1.msra.mxu0 %v551
  %657 = vmatprep.subr.mxu0 %v558
  %658 = vmatpush1.msra.mxu0 %v557
  %659 = vmatprep.subr.mxu0 %v564
  %660 = vmatpush1.msra.mxu0 %v563
  %661 = vmatprep.subr.mxu0 %v570
  %662 = vmatpush1.msra.mxu0 %v569
  %663 = vmatprep.subr.mxu0 0.0
  %664 = vmatpush1.msra.mxu0 0.0
  %665 = vmatprep.subr.mxu0 0.0
  %666 = vmatpush1.msra.mxu0 0.0
  %667 = vmatprep.subr.mxu0 0.0
  %668 = vmatpush1.msra.mxu0 0.0
  %669 = vmatprep.subr.mxu0 0.0
  %670 = vmatpush1.msra.mxu0 0.0
  %671 = vmatprep.subr.mxu0 0.0
  %672 = vmatpush1.msra.mxu0 0.0
  %673 = vmatprep.subr.mxu0 0.0
  %674 = vmatpush1.msra.mxu0 0.0
  %675 = vmatprep.subr.mxu0 0.0
  %676 = vmatpush1.msra.mxu0 0.0
  %677 = vmatprep.subr.mxu0 0.0
  %678 = vmatpush1.msra.mxu0 0.0
  %679 = vmatprep.subr.mxu0 0.0
  %680 = vmatpush1.msra.mxu0 0.0
  %681 = vmatprep.subr.mxu0 0.0
  %682 = vmatpush1.msra.mxu0 0.0
  %683 = vmatprep.subr.mxu0 0.0
  %684 = vmatpush1.msra.mxu0 0.0
  %685 = vmatprep.subr.mxu0 0.0
  %686 = vmatpush1.msra.mxu0 0.0
  %687 = vmatprep.subr.mxu0 0.0
  %688 = vmatpush1.msra.mxu0 0.0
  %689 = vmatprep.subr.mxu0 0.0
  %690 = vmatpush1.msra.mxu0 0.0
  %691 = vmatprep.subr.mxu0 0.0
  %692 = vmatpush1.msra.mxu0 0.0
  %693 = vmatprep.subr.mxu0 0.0
  %694 = vmatpush1.msra.mxu0 0.0
  %695 = vmatprep.subr.mxu0 0.0
  %696 = vmatpush1.msra.mxu0 0.0
  %697 = vmatprep.subr.mxu0 0.0
  %698 = vmatpush1.msra.mxu0 0.0
  %699 = vmatprep.subr.mxu0 0.0
  %700 = vmatpush1.msra.mxu0 0.0
  %701 = vmatprep.subr.mxu0 0.0
  %702 = vmatpush1.msra.mxu0 0.0
  %703 = vmatprep.subr.mxu0 0.0
  %704 = vmatpush1.msra.mxu0 0.0
  %705 = vmatprep.subr.mxu0 0.0
  %706 = vmatpush1.msra.mxu0 0.0
  %707 = vmatprep.subr.mxu0 0.0
  %708 = vmatpush1.msra.mxu0 0.0
  %709 = vmatprep.subr.mxu0 0.0
  %710 = vmatpush1.msra.mxu0 0.0
  %711 = vmatprep.mubr.f32.mxu0 0.0
  %712 = vmatmul.mubr.f32.gmra.mrb[0].mxu0 %v574
  %v713 = vpop.f32.mrb[0].mxu0
  %v714 = vadd.f32 0.0, %v713
  %v715 = vpop.f32.mrb[0].mxu0
  %v716 = vadd.f32 0.0, %v715
  %717 = vdwg.mxu0
  %718 = vmatprep.subr.mxu0 %v530
  %719 = vmatpush1.msra.mxu0 %v529
  %720 = vmatprep.subr.mxu0 %v536
  %721 = vmatpush1.msra.mxu0 %v535
  %722 = vmatprep.subr.mxu0 %v542
  %723 = vmatpush1.msra.mxu0 %v541
  %724 = vmatprep.subr.mxu0 %v548
  %725 = vmatpush1.msra.mxu0 %v547
  %726 = vmatprep.subr.mxu0 %v554
  %727 = vmatpush1.msra.mxu0 %v553
  %728 = vmatprep.subr.mxu0 %v560
  %729 = vmatpush1.msra.mxu0 %v559
  %730 = vmatprep.subr.mxu0 %v566
  %731 = vmatpush1.msra.mxu0 %v565
  %732 = vmatprep.subr.mxu0 %v572
  %733 = vmatpush1.msra.mxu0 %v571
  %734 = vmatprep.subr.mxu0 0.0
  %735 = vmatpush1.msra.mxu0 0.0
  %736 = vmatprep.subr.mxu0 0.0
  %737 = vmatpush1.msra.mxu0 0.0
  %738 = vmatprep.subr.mxu0 0.0
  %739 = vmatpush1.msra.mxu0 0.0
  %740 = vmatprep.subr.mxu0 0.0
  %741 = vmatpush1.msra.mxu0 0.0
  %742 = vmatprep.subr.mxu0 0.0
  %743 = vmatpush1.msra.mxu0 0.0
  %744 = vmatprep.subr.mxu0 0.0
  %745 = vmatpush1.msra.mxu0 0.0
  %746 = vmatprep.subr.mxu0 0.0
  %747 = vmatpush1.msra.mxu0 0.0
  %748 = vmatprep.subr.mxu0 0.0
  %749 = vmatpush1.msra.mxu0 0.0
  %750 = vmatprep.subr.mxu0 0.0
  %751 = vmatpush1.msra.mxu0 0.0
  %752 = vmatprep.subr.mxu0 0.0
  %753 = vmatpush1.msra.mxu0 0.0
  %754 = vmatprep.subr.mxu0 0.0
  %755 = vmatpush1.msra.mxu0 0.0
  %756 = vmatprep.subr.mxu0 0.0
  %757 = vmatpush1.msra.mxu0 0.0
  %758 = vmatprep.subr.mxu0 0.0
  %759 = vmatpush1.msra.mxu0 0.0
  %760 = vmatprep.subr.mxu0 0.0
  %761 = vmatpush1.msra.mxu0 0.0
  %762 = vmatprep.subr.mxu0 0.0
  %763 = vmatpush1.msra.mxu0 0.0
  %764 = vmatprep.subr.mxu0 0.0
  %765 = vmatpush1.msra.mxu0 0.0
  %766 = vmatprep.subr.mxu0 0.0
  %767 = vmatpush1.msra.mxu0 0.0
  %768 = vmatprep.subr.mxu0 0.0
  %769 = vmatpush1.msra.mxu0 0.0
  %770 = vmatprep.subr.mxu0 0.0
  %771 = vmatpush1.msra.mxu0 0.0
  %772 = vmatprep.subr.mxu0 0.0
  %773 = vmatpush1.msra.mxu0 0.0
  %774 = vmatprep.subr.mxu0 0.0
  %775 = vmatpush1.msra.mxu0 0.0
  %776 = vmatprep.subr.mxu0 0.0
  %777 = vmatpush1.msra.mxu0 0.0
  %778 = vmatprep.subr.mxu0 0.0
  %779 = vmatpush1.msra.mxu0 0.0
  %780 = vmatprep.subr.mxu0 0.0
  %781 = vmatpush1.msra.mxu0 0.0
  %782 = vmatprep.mubr.f32.mxu0 0.0
  %783 = vmatmul.mubr.f32.gmra.mrb[0].mxu0 %v574
  %v784 = vpop.f32.mrb[0].mxu0
  %v785 = vadd.f32 0.0, %v784
  %v786 = vpop.f32.mrb[0].mxu0
  %v787 = vadd.f32 0.0, %v786
  %788 = vdwg.mxu0
  %v789 = vld [vmem:[%s3] sm:$0x3]
  %s790 = scalar_lea.vmem %s3, 2
  %v791 = vld [vmem:[%s790] sm:$0x3]
  %794 = vrot.lane.b32.xlu0 %v645, 64
  %v795 = vpop.permute.xlu0 %794
  %796 = vrot.lane.b32.xlu0 %v714, 64
  %v797 = vpop.permute.xlu0 %796
  %v798 = vsel %vm198, %v795, %v797
  %vm801 = vcmask 64512
  %v803 = vsel %vm801, %v791, 0
  %805 = vmatprep.subr.mxu0 %v797
  %806 = vmatpush1.msra.mxu0 %v798
  %807 = vmatprep.subr.mxu0 0.0
  %808 = vmatpush1.msra.mxu0 0.0
  %809 = vmatprep.subr.mxu0 0.0
  %810 = vmatpush1.msra.mxu0 0.0
  %811 = vmatprep.subr.mxu0 0.0
  %812 = vmatpush1.msra.mxu0 0.0
  %813 = vmatprep.subr.mxu0 0.0
  %814 = vmatpush1.msra.mxu0 0.0
  %815 = vmatprep.subr.mxu0 0.0
  %816 = vmatpush1.msra.mxu0 0.0
  %817 = vmatprep.subr.mxu0 0.0
  %818 = vmatpush1.msra.mxu0 0.0
  %819 = vmatprep.subr.mxu0 0.0
  %820 = vmatpush1.msra.mxu0 0.0
  %821 = vmatprep.subr.mxu0 0.0
  %822 = vmatpush1.msra.mxu0 0.0
  %823 = vmatprep.subr.mxu0 0.0
  %824 = vmatpush1.msra.mxu0 0.0
  %825 = vmatprep.subr.mxu0 0.0
  %826 = vmatpush1.msra.mxu0 0.0
  %827 = vmatprep.subr.mxu0 0.0
  %828 = vmatpush1.msra.mxu0 0.0
  %829 = vmatprep.subr.mxu0 0.0
  %830 = vmatpush1.msra.mxu0 0.0
  %831 = vmatprep.subr.mxu0 0.0
  %832 = vmatpush1.msra.mxu0 0.0
  %833 = vmatprep.subr.mxu0 0.0
  %834 = vmatpush1.msra.mxu0 0.0
  %835 = vmatprep.subr.mxu0 0.0
  %836 = vmatpush1.msra.mxu0 0.0
  %837 = vmatprep.subr.mxu0 0.0
  %838 = vmatpush1.msra.mxu0 0.0
  %839 = vmatprep.subr.mxu0 0.0
  %840 = vmatpush1.msra.mxu0 0.0
  %841 = vmatprep.subr.mxu0 0.0
  %842 = vmatpush1.msra.mxu0 0.0
  %843 = vmatprep.subr.mxu0 0.0
  %844 = vmatpush1.msra.mxu0 0.0
  %845 = vmatprep.subr.mxu0 0.0
  %846 = vmatpush1.msra.mxu0 0.0
  %847 = vmatprep.subr.mxu0 0.0
  %848 = vmatpush1.msra.mxu0 0.0
  %849 = vmatprep.subr.mxu0 0.0
  %850 = vmatpush1.msra.mxu0 0.0
  %851 = vmatprep.subr.mxu0 0.0
  %852 = vmatpush1.msra.mxu0 0.0
  %853 = vmatprep.subr.mxu0 0.0
  %854 = vmatpush1.msra.mxu0 0.0
  %855 = vmatprep.subr.mxu0 0.0
  %856 = vmatpush1.msra.mxu0 0.0
  %857 = vmatprep.subr.mxu0 0.0
  %858 = vmatpush1.msra.mxu0 0.0
  %859 = vmatprep.subr.mxu0 0.0
  %860 = vmatpush1.msra.mxu0 0.0
  %861 = vmatprep.subr.mxu0 0.0
  %862 = vmatpush1.msra.mxu0 0.0
  %863 = vmatprep.subr.mxu0 0.0
  %864 = vmatpush1.msra.mxu0 0.0
  %865 = vmatprep.subr.mxu0 0.0
  %866 = vmatpush1.msra.mxu0 0.0
  %867 = vmatprep.subr.mxu0 0.0
  %868 = vmatpush1.msra.mxu0 0.0
  %869 = vmatprep.mubr.f32.mxu0 0.0
  %870 = vmatmul.mubr.f32.gmra.mrb[0].mxu0 %v803
  %v871 = vpop.f32.mrb[0].mxu0
  %v872 = vadd.f32 0.0, %v871
  %v873 = vpop.f32.mrb[0].mxu0
  %v874 = vadd.f32 0.0, %v873
  %875 = vdwg.mxu0
  %v877 = vsel %vm801, %v789, 0
  %879 = vmatprep.subr.mxu0 %v645
  %880 = vmatpush1.msra.mxu0 %v643
  %881 = vmatprep.subr.mxu0 0.0
  %882 = vmatpush1.msra.mxu0 0.0
  %883 = vmatprep.subr.mxu0 0.0
  %884 = vmatpush1.msra.mxu0 0.0
  %885 = vmatprep.subr.mxu0 0.0
  %886 = vmatpush1.msra.mxu0 0.0
  %887 = vmatprep.subr.mxu0 0.0
  %888 = vmatpush1.msra.mxu0 0.0
  %889 = vmatprep.subr.mxu0 0.0
  %890 = vmatpush1.msra.mxu0 0.0
  %891 = vmatprep.subr.mxu0 0.0
  %892 = vmatpush1.msra.mxu0 0.0
  %893 = vmatprep.subr.mxu0 0.0
  %894 = vmatpush1.msra.mxu0 0.0
  %895 = vmatprep.subr.mxu0 0.0
  %896 = vmatpush1.msra.mxu0 0.0
  %897 = vmatprep.subr.mxu0 0.0
  %898 = vmatpush1.msra.mxu0 0.0
  %899 = vmatprep.subr.mxu0 0.0
  %900 = vmatpush1.msra.mxu0 0.0
  %901 = vmatprep.subr.mxu0 0.0
  %902 = vmatpush1.msra.mxu0 0.0
  %903 = vmatprep.subr.mxu0 0.0
  %904 = vmatpush1.msra.mxu0 0.0
  %905 = vmatprep.subr.mxu0 0.0
  %906 = vmatpush1.msra.mxu0 0.0
  %907 = vmatprep.subr.mxu0 0.0
  %908 = vmatpush1.msra.mxu0 0.0
  %909 = vmatprep.subr.mxu0 0.0
  %910 = vmatpush1.msra.mxu0 0.0
  %911 = vmatprep.subr.mxu0 0.0
  %912 = vmatpush1.msra.mxu0 0.0
  %913 = vmatprep.subr.mxu0 0.0
  %914 = vmatpush1.msra.mxu0 0.0
  %915 = vmatprep.subr.mxu0 0.0
  %916 = vmatpush1.msra.mxu0 0.0
  %917 = vmatprep.subr.mxu0 0.0
  %918 = vmatpush1.msra.mxu0 0.0
  %919 = vmatprep.subr.mxu0 0.0
  %920 = vmatpush1.msra.mxu0 0.0
  %921 = vmatprep.subr.mxu0 0.0
  %922 = vmatpush1.msra.mxu0 0.0
  %923 = vmatprep.subr.mxu0 0.0
  %924 = vmatpush1.msra.mxu0 0.0
  %925 = vmatprep.subr.mxu0 0.0
  %926 = vmatpush1.msra.mxu0 0.0
  %927 = vmatprep.subr.mxu0 0.0
  %928 = vmatpush1.msra.mxu0 0.0
  %929 = vmatprep.subr.mxu0 0.0
  %930 = vmatpush1.msra.mxu0 0.0
  %931 = vmatprep.subr.mxu0 0.0
  %932 = vmatpush1.msra.mxu0 0.0
  %933 = vmatprep.subr.mxu0 0.0
  %934 = vmatpush1.msra.mxu0 0.0
  %935 = vmatprep.subr.mxu0 0.0
  %936 = vmatpush1.msra.mxu0 0.0
  %937 = vmatprep.subr.mxu0 0.0
  %938 = vmatpush1.msra.mxu0 0.0
  %939 = vmatprep.subr.mxu0 0.0
  %940 = vmatpush1.msra.mxu0 0.0
  %941 = vmatprep.subr.mxu0 0.0
  %942 = vmatpush1.msra.mxu0 0.0
  %943 = vmatprep.mubr.f32.mxu0 0.0
  %944 = vmatmul.mubr.f32.gmra.mrb[0].mxu0 %v877
  %v945 = vpop.f32.mrb[0].mxu0
  %v946 = vadd.f32 %v872, %v945
  %v947 = vpop.f32.mrb[0].mxu0
  %v948 = vadd.f32 %v874, %v947
  %949 = vdwg.mxu0
  %s950 = scalar_lea.vmem %s3, 4
  %v951 = vld [vmem:[%s950] sm:$0x3]
  %v953 = vsel %vm801, %v951, 0
  %955 = vmatprep.subr.mxu0 %v785
  %956 = vmatpush1.msra.mxu0 %v716
  %957 = vmatprep.subr.mxu0 0.0
  %958 = vmatpush1.msra.mxu0 0.0
  %959 = vmatprep.subr.mxu0 0.0
  %960 = vmatpush1.msra.mxu0 0.0
  %961 = vmatprep.subr.mxu0 0.0
  %962 = vmatpush1.msra.mxu0 0.0
  %963 = vmatprep.subr.mxu0 0.0
  %964 = vmatpush1.msra.mxu0 0.0
  %965 = vmatprep.subr.mxu0 0.0
  %966 = vmatpush1.msra.mxu0 0.0
  %967 = vmatprep.subr.mxu0 0.0
  %968 = vmatpush1.msra.mxu0 0.0
  %969 = vmatprep.subr.mxu0 0.0
  %970 = vmatpush1.msra.mxu0 0.0
  %971 = vmatprep.subr.mxu0 0.0
  %972 = vmatpush1.msra.mxu0 0.0
  %973 = vmatprep.subr.mxu0 0.0
  %974 = vmatpush1.msra.mxu0 0.0
  %975 = vmatprep.subr.mxu0 0.0
  %976 = vmatpush1.msra.mxu0 0.0
  %977 = vmatprep.subr.mxu0 0.0
  %978 = vmatpush1.msra.mxu0 0.0
  %979 = vmatprep.subr.mxu0 0.0
  %980 = vmatpush1.msra.mxu0 0.0
  %981 = vmatprep.subr.mxu0 0.0
  %982 = vmatpush1.msra.mxu0 0.0
  %983 = vmatprep.subr.mxu0 0.0
  %984 = vmatpush1.msra.mxu0 0.0
  %985 = vmatprep.subr.mxu0 0.0
  %986 = vmatpush1.msra.mxu0 0.0
  %987 = vmatprep.subr.mxu0 0.0
  %988 = vmatpush1.msra.mxu0 0.0
  %989 = vmatprep.subr.mxu0 0.0
  %990 = vmatpush1.msra.mxu0 0.0
  %991 = vmatprep.subr.mxu0 0.0
  %992 = vmatpush1.msra.mxu0 0.0
  %993 = vmatprep.subr.mxu0 0.0
  %994 = vmatpush1.msra.mxu0 0.0
  %995 = vmatprep.subr.mxu0 0.0
  %996 = vmatpush1.msra.mxu0 0.0
  %997 = vmatprep.subr.mxu0 0.0
  %998 = vmatpush1.msra.mxu0 0.0
  %999 = vmatprep.subr.mxu0 0.0
  %1000 = vmatpush1.msra.mxu0 0.0
  %1001 = vmatprep.subr.mxu0 0.0
  %1002 = vmatpush1.msra.mxu0 0.0
  %1003 = vmatprep.subr.mxu0 0.0
  %1004 = vmatpush1.msra.mxu0 0.0
  %1005 = vmatprep.subr.mxu0 0.0
  %1006 = vmatpush1.msra.mxu0 0.0
  %1007 = vmatprep.subr.mxu0 0.0
  %1008 = vmatpush1.msra.mxu0 0.0
  %1009 = vmatprep.subr.mxu0 0.0
  %1010 = vmatpush1.msra.mxu0 0.0
  %1011 = vmatprep.subr.mxu0 0.0
  %1012 = vmatpush1.msra.mxu0 0.0
  %1013 = vmatprep.subr.mxu0 0.0
  %1014 = vmatpush1.msra.mxu0 0.0
  %1015 = vmatprep.subr.mxu0 0.0
  %1016 = vmatpush1.msra.mxu0 0.0
  %1017 = vmatprep.subr.mxu0 0.0
  %1018 = vmatpush1.msra.mxu0 0.0
  %1019 = vmatprep.mubr.f32.mxu0 0.0
  %1020 = vmatmul.mubr.f32.gmra.mrb[0].mxu0 %v953
  %v1021 = vpop.f32.mrb[0].mxu0
  %v1022 = vadd.f32 0.0, %v1021
  %v1023 = vpop.f32.mrb[0].mxu0
  %v1024 = vadd.f32 0.0, %v1023
  %1025 = vdwg.mxu0
  %v1026 = vadd.f32 %v946, %v1022
  %v1027 = vadd.f32 %v948, %v1024
  %s1028 = scalar_lea.vmem %s3, 6
  %v1029 = vld [vmem:[%s1028] sm:$0x3]
  %1032 = vrot.lane.b32.xlu0 %v785, 64
  %v1033 = vpop.permute.xlu0 %1032
  %1034 = vrot.lane.b32.xlu0 %v787, 64
  %v1035 = vpop.permute.xlu0 %1034
  %v1036 = vsel %vm198, %v1033, %v1035
  %v1040 = vsel %vm801, %v1029, 0
  %1042 = vmatprep.subr.mxu0 %v1035
  %1043 = vmatpush1.msra.mxu0 %v1036
  %1044 = vmatprep.subr.mxu0 0.0
  %1045 = vmatpush1.msra.mxu0 0.0
  %1046 = vmatprep.subr.mxu0 0.0
  %1047 = vmatpush1.msra.mxu0 0.0
  %1048 = vmatprep.subr.mxu0 0.0
  %1049 = vmatpush1.msra.mxu0 0.0
  %1050 = vmatprep.subr.mxu0 0.0
  %1051 = vmatpush1.msra.mxu0 0.0
  %1052 = vmatprep.subr.mxu0 0.0
  %1053 = vmatpush1.msra.mxu0 0.0
  %1054 = vmatprep.subr.mxu0 0.0
  %1055 = vmatpush1.msra.mxu0 0.0
  %1056 = vmatprep.subr.mxu0 0.0
  %1057 = vmatpush1.msra.mxu0 0.0
  %1058 = vmatprep.subr.mxu0 0.0
  %1059 = vmatpush1.msra.mxu0 0.0
  %1060 = vmatprep.subr.mxu0 0.0
  %1061 = vmatpush1.msra.mxu0 0.0
  %1062 = vmatprep.subr.mxu0 0.0
  %1063 = vmatpush1.msra.mxu0 0.0
  %1064 = vmatprep.subr.mxu0 0.0
  %1065 = vmatpush1.msra.mxu0 0.0
  %1066 = vmatprep.subr.mxu0 0.0
  %1067 = vmatpush1.msra.mxu0 0.0
  %1068 = vmatprep.subr.mxu0 0.0
  %1069 = vmatpush1.msra.mxu0 0.0
  %1070 = vmatprep.subr.mxu0 0.0
  %1071 = vmatpush1.msra.mxu0 0.0
  %1072 = vmatprep.subr.mxu0 0.0
  %1073 = vmatpush1.msra.mxu0 0.0
  %1074 = vmatprep.subr.mxu0 0.0
  %1075 = vmatpush1.msra.mxu0 0.0
  %1076 = vmatprep.subr.mxu0 0.0
  %1077 = vmatpush1.msra.mxu0 0.0
  %1078 = vmatprep.subr.mxu0 0.0
  %1079 = vmatpush1.msra.mxu0 0.0
  %1080 = vmatprep.subr.mxu0 0.0
  %1081 = vmatpush1.msra.mxu0 0.0
  %1082 = vmatprep.subr.mxu0 0.0
  %1083 = vmatpush1.msra.mxu0 0.0
  %1084 = vmatprep.subr.mxu0 0.0
  %1085 = vmatpush1.msra.mxu0 0.0
  %1086 = vmatprep.subr.mxu0 0.0
  %1087 = vmatpush1.msra.mxu0 0.0
  %1088 = vmatprep.subr.mxu0 0.0
  %1089 = vmatpush1.msra.mxu0 0.0
  %1090 = vmatprep.subr.mxu0 0.0
  %1091 = vmatpush1.msra.mxu0 0.0
  %1092 = vmatprep.subr.mxu0 0.0
  %1093 = vmatpush1.msra.mxu0 0.0
  %1094 = vmatprep.subr.mxu0 0.0
  %1095 = vmatpush1.msra.mxu0 0.0
  %1096 = vmatprep.subr.mxu0 0.0
  %1097 = vmatpush1.msra.mxu0 0.0
  %1098 = vmatprep.subr.mxu0 0.0
  %1099 = vmatpush1.msra.mxu0 0.0
  %1100 = vmatprep.subr.mxu0 0.0
  %1101 = vmatpush1.msra.mxu0 0.0
  %1102 = vmatprep.subr.mxu0 0.0
  %1103 = vmatpush1.msra.mxu0 0.0
  %1104 = vmatprep.subr.mxu0 0.0
  %1105 = vmatpush1.msra.mxu0 0.0
  %1106 = vmatprep.mubr.f32.mxu0 0.0
  %1107 = vmatmul.mubr.f32.gmra.mrb[0].mxu0 %v1040
  %v1108 = vpop.f32.mrb[0].mxu0
  %v1109 = vadd.f32 0.0, %v1108
  %v1110 = vpop.f32.mrb[0].mxu0
  %v1111 = vadd.f32 0.0, %v1110
  %1112 = vdwg.mxu0
  %v1113 = vadd.f32 %v1026, %v1109
  %v1114 = vadd.f32 %v1027, %v1111
  %v1115 = vld [vmem:[%s1] sm:$0x3]
  %v1116 = vld [vmem:[%s9] sm:$0xff]
  %v1118 = vcombine.high %v1116, %v1116
  %vm1119 = vcmask 31744
  %v1121 = vsel %vm1119, %v1115, 0
  %vm1123 = vcmask 1043456
  %v1124 = vsel %vm1123, %v1116, 0
  %v1126 = vsel %vm1123, %v1118, 0
  %1128 = vmatprep.subr.mxu0 %v1126
  %1129 = vmatpush1.msra.mxu0 %v1124
  %1130 = vmatprep.subr.mxu0 0.0
  %1131 = vmatpush1.msra.mxu0 0.0
  %1132 = vmatprep.subr.mxu0 0.0
  %1133 = vmatpush1.msra.mxu0 0.0
  %1134 = vmatprep.subr.mxu0 0.0
  %1135 = vmatpush1.msra.mxu0 0.0
  %1136 = vmatprep.subr.mxu0 0.0
  %1137 = vmatpush1.msra.mxu0 0.0
  %1138 = vmatprep.subr.mxu0 0.0
  %1139 = vmatpush1.msra.mxu0 0.0
  %1140 = vmatprep.subr.mxu0 0.0
  %1141 = vmatpush1.msra.mxu0 0.0
  %1142 = vmatprep.subr.mxu0 0.0
  %1143 = vmatpush1.msra.mxu0 0.0
  %1144 = vmatprep.subr.mxu0 0.0
  %1145 = vmatpush1.msra.mxu0 0.0
  %1146 = vmatprep.subr.mxu0 0.0
  %1147 = vmatpush1.msra.mxu0 0.0
  %1148 = vmatprep.subr.mxu0 0.0
  %1149 = vmatpush1.msra.mxu0 0.0
  %1150 = vmatprep.subr.mxu0 0.0
  %1151 = vmatpush1.msra.mxu0 0.0
  %1152 = vmatprep.subr.mxu0 0.0
  %1153 = vmatpush1.msra.mxu0 0.0
  %1154 = vmatprep.subr.mxu0 0.0
  %1155 = vmatpush1.msra.mxu0 0.0
  %1156 = vmatprep.subr.mxu0 0.0
  %1157 = vmatpush1.msra.mxu0 0.0
  %1158 = vmatprep.subr.mxu0 0.0
  %1159 = vmatpush1.msra.mxu0 0.0
  %1160 = vmatprep.subr.mxu0 0.0
  %1161 = vmatpush1.msra.mxu0 0.0
  %1162 = vmatprep.subr.mxu0 0.0
  %1163 = vmatpush1.msra.mxu0 0.0
  %1164 = vmatprep.subr.mxu0 0.0
  %1165 = vmatpush1.msra.mxu0 0.0
  %1166 = vmatprep.subr.mxu0 0.0
  %1167 = vmatpush1.msra.mxu0 0.0
  %1168 = vmatprep.subr.mxu0 0.0
  %1169 = vmatpush1.msra.mxu0 0.0
  %1170 = vmatprep.subr.mxu0 0.0
  %1171 = vmatpush1.msra.mxu0 0.0
  %1172 = vmatprep.subr.mxu0 0.0
  %1173 = vmatpush1.msra.mxu0 0.0
  %1174 = vmatprep.subr.mxu0 0.0
  %1175 = vmatpush1.msra.mxu0 0.0
  %1176 = vmatprep.subr.mxu0 0.0
  %1177 = vmatpush1.msra.mxu0 0.0
  %1178 = vmatprep.subr.mxu0 0.0
  %1179 = vmatpush1.msra.mxu0 0.0
  %1180 = vmatprep.subr.mxu0 0.0
  %1181 = vmatpush1.msra.mxu0 0.0
  %1182 = vmatprep.subr.mxu0 0.0
  %1183 = vmatpush1.msra.mxu0 0.0
  %1184 = vmatprep.subr.mxu0 0.0
  %1185 = vmatpush1.msra.mxu0 0.0
  %1186 = vmatprep.subr.mxu0 0.0
  %1187 = vmatpush1.msra.mxu0 0.0
  %1188 = vmatprep.subr.mxu0 0.0
  %1189 = vmatpush1.msra.mxu0 0.0
  %1190 = vmatprep.subr.mxu0 0.0
  %1191 = vmatpush1.msra.mxu0 0.0
  %1192 = vmatprep.mubr.f32.mxu0 0.0
  %1193 = vmatmul.mubr.f32.gmra.mrb[0].mxu0 %v1121
  %v1194 = vpop.f32.mrb[0].mxu0
  %v1195 = vadd.f32 0.0, %v1194
  %v1196 = vpop.f32.mrb[0].mxu0
  %v1197 = vadd.f32 0.0, %v1196
  %1198 = vdwg.mxu0
  %v1199 = vadd.f32 %v1113, %v1195
  %v1200 = vadd.f32 %v1114, %v1197
  %v1201 = vld [vmem:[%s10] sm:$0x3]
  %v1203 = vlaneseq
  %v1204 = vshrl.u32 %v1203, 7
  %v1205 = vsub.s32 0, %v1204
  %v1206 = vrot.slane %v1201, %v1205
  %v1207 = vlaneseq
  %v1208 = vshrl.u32 %v1207, 7
  %v1209 = vsub.s32 1, %v1208
  %v1210 = vrot.slane %v1201, %v1209
  %v1213 = vadd.f32 %v1199, %v1206
  %v1214 = vadd.f32 %v1200, %v1210
  %v1215 = vmax.f32 %v1213, 0.0
  %v1216 = vmax.f32 %v1214, 0.0
  %v1217 = vld [vmem:[%s11] sm:$0xff]
  %v1218 = vld [vmem:[%s11 + $0x8] sm:$0xff]
  %v1219 = vld [vmem:[%s11 + $0x10] sm:$0xff]
  %v1220 = vld [vmem:[%s11 + $0x18] sm:$0xff]
  %v1221 = vld [vmem:[%s11 + $0x20] sm:$0xff]
  %v1222 = vld [vmem:[%s11 + $0x28] sm:$0xff]
  %v1223 = vld [vmem:[%s11 + $0x30] sm:$0xff]
  %v1224 = vld [vmem:[%s11 + $0x38] sm:$0xff]
  %v1225 = vld [vmem:[%s11 + $0x40] sm:$0xff]
  %v1226 = vld [vmem:[%s11 + $0x48] sm:$0xff]
  %v1227 = vld [vmem:[%s11 + $0x50] sm:$0xff]
  %v1228 = vld [vmem:[%s11 + $0x58] sm:$0xff]
  %v1229 = vld [vmem:[%s11 + $0x60] sm:$0xff]
  %v1230 = vld [vmem:[%s11 + $0x68] sm:$0xff]
  %v1231 = vld [vmem:[%s11 + $0x70] sm:$0xff]
  %v1232 = vld [vmem:[%s11 + $0x78] sm:$0xff]
  %v1233 = vld [vmem:[%s11 + $0x80] sm:$0xff]
  %v1234 = vld [vmem:[%s11 + $0x88] sm:$0xff]
  %v1235 = vld [vmem:[%s11 + $0x90] sm:$0xff]
  %v1236 = vld [vmem:[%s11 + $0x98] sm:$0xff]
  %v1237 = vld [vmem:[%s11 + $0xa0] sm:$0xff]
  %v1238 = vld [vmem:[%s11 + $0xa8] sm:$0xff]
  %v1239 = vld [vmem:[%s11 + $0xb0] sm:$0xff]
  %v1240 = vld [vmem:[%s11 + $0xb8] sm:$0xff]
  %v1241 = vld [vmem:[%s11 + $0xc0] sm:$0xff]
  %v1242 = vld [vmem:[%s11 + $0xc8] sm:$0xff]
  %v1243 = vld [vmem:[%s11 + $0xd0] sm:$0xff]
  %v1244 = vld [vmem:[%s11 + $0xd8] sm:$0xff]
  %v1245 = vld [vmem:[%s11 + $0xe0] sm:$0xff]
  %v1246 = vld [vmem:[%s11 + $0xe8] sm:$0xff]
  %v1247 = vld [vmem:[%s11 + $0xf0] sm:$0xff]
  %v1248 = vld [vmem:[%s11 + $0xf8] sm:$0xff]
  %v1249 = vld [vmem:[%s11 + $0x100] sm:$0xff]
  %v1250 = vld [vmem:[%s11 + $0x108] sm:$0xff]
  %v1251 = vld [vmem:[%s11 + $0x110] sm:$0xff]
  %v1252 = vld [vmem:[%s11 + $0x118] sm:$0xff]
  %v1253 = vld [vmem:[%s11 + $0x120] sm:$0xff]
  %v1254 = vld [vmem:[%s11 + $0x128] sm:$0xff]
  %v1255 = vld [vmem:[%s11 + $0x130] sm:$0xff]
  %v1256 = vld [vmem:[%s11 + $0x138] sm:$0xff]
  %v1257 = vld [vmem:[%s11 + $0x140] sm:$0xff]
  %v1258 = vld [vmem:[%s11 + $0x148] sm:$0xff]
  %v1259 = vld [vmem:[%s11 + $0x150] sm:$0xff]
  %v1260 = vld [vmem:[%s11 + $0x158] sm:$0xff]
  %v1261 = vld [vmem:[%s11 + $0x160] sm:$0xff]
  %v1262 = vld [vmem:[%s11 + $0x168] sm:$0xff]
  %v1263 = vld [vmem:[%s11 + $0x170] sm:$0xff]
  %v1264 = vld [vmem:[%s11 + $0x178] sm:$0xff]
  %v1265 = vld [vmem:[%s12] sm:$0x3]
  %v1267 = vlaneseq
  %v1268 = vshrl.u32 %v1267, 7
  %v1269 = vsub.s32 0, %v1268
  %v1270 = vrot.slane %v1265, %v1269
  %v1271 = vlaneseq
  %v1272 = vshrl.u32 %v1271, 7
  %v1273 = vsub.s32 1, %v1272
  %v1274 = vrot.slane %v1265, %v1273
  %v1278 = vsel %vm198, %v1216, 0
  %1280 = vmatprep.subr.mxu0 %v1218
  %1281 = vmatpush1.msra.mxu0 %v1217
  %1282 = vmatprep.subr.mxu0 %v1220
  %1283 = vmatpush1.msra.mxu0 %v1219
  %1284 = vmatprep.subr.mxu0 %v1222
  %1285 = vmatpush1.msra.mxu0 %v1221
  %1286 = vmatprep.subr.mxu0 %v1224
  %1287 = vmatpush1.msra.mxu0 %v1223
  %1288 = vmatprep.subr.mxu0 %v1226
  %1289 = vmatpush1.msra.mxu0 %v1225
  %1290 = vmatprep.subr.mxu0 %v1228
  %1291 = vmatpush1.msra.mxu0 %v1227
  %1292 = vmatprep.subr.mxu0 %v1230
  %1293 = vmatpush1.msra.mxu0 %v1229
  %1294 = vmatprep.subr.mxu0 %v1232
  %1295 = vmatpush1.msra.mxu0 %v1231
  %1296 = vmatprep.subr.mxu0 %v1234
  %1297 = vmatpush1.msra.mxu0 %v1233
  %1298 = vmatprep.subr.mxu0 %v1236
  %1299 = vmatpush1.msra.mxu0 %v1235
  %1300 = vmatprep.subr.mxu0 %v1238
  %1301 = vmatpush1.msra.mxu0 %v1237
  %1302 = vmatprep.subr.mxu0 %v1240
  %1303 = vmatpush1.msra.mxu0 %v1239
  %1304 = vmatprep.subr.mxu0 %v1242
  %1305 = vmatpush1.msra.mxu0 %v1241
  %1306 = vmatprep.subr.mxu0 %v1244
  %1307 = vmatpush1.msra.mxu0 %v1243
  %1308 = vmatprep.subr.mxu0 %v1246
  %1309 = vmatpush1.msra.mxu0 %v1245
  %1310 = vmatprep.subr.mxu0 %v1248
  %1311 = vmatpush1.msra.mxu0 %v1247
  %1312 = vmatprep.subr.mxu0 %v1250
  %1313 = vmatpush1.msra.mxu0 %v1249
  %1314 = vmatprep.subr.mxu0 %v1252
  %1315 = vmatpush1.msra.mxu0 %v1251
  %1316 = vmatprep.subr.mxu0 %v1254
  %1317 = vmatpush1.msra.mxu0 %v1253
  %1318 = vmatprep.subr.mxu0 %v1256
  %1319 = vmatpush1.msra.mxu0 %v1255
  %1320 = vmatprep.subr.mxu0 %v1258
  %1321 = vmatpush1.msra.mxu0 %v1257
  %1322 = vmatprep.subr.mxu0 %v1260
  %1323 = vmatpush1.msra.mxu0 %v1259
  %1324 = vmatprep.subr.mxu0 %v1262
  %1325 = vmatpush1.msra.mxu0 %v1261
  %1326 = vmatprep.subr.mxu0 %v1264
  %1327 = vmatpush1.msra.mxu0 %v1263
  %1328 = vmatprep.subr.mxu0 0.0
  %1329 = vmatpush1.msra.mxu0 0.0
  %1330 = vmatprep.subr.mxu0 0.0
  %1331 = vmatpush1.msra.mxu0 0.0
  %1332 = vmatprep.subr.mxu0 0.0
  %1333 = vmatpush1.msra.mxu0 0.0
  %1334 = vmatprep.subr.mxu0 0.0
  %1335 = vmatpush1.msra.mxu0 0.0
  %1336 = vmatprep.subr.mxu0 0.0
  %1337 = vmatpush1.msra.mxu0 0.0
  %1338 = vmatprep.subr.mxu0 0.0
  %1339 = vmatpush1.msra.mxu0 0.0
  %1340 = vmatprep.subr.mxu0 0.0
  %1341 = vmatpush1.msra.mxu0 0.0
  %1342 = vmatprep.subr.mxu0 0.0
  %1343 = vmatpush1.msra.mxu0 0.0
  %1344 = vmatprep.mubr.f32.mxu0 %v1278
  %1345 = vmatmul.mubr.f32.gmra.mrb[0].mxu0 %v1215
  %v1346 = vpop.f32.mrb[0].mxu0
  %v1347 = vadd.f32 %v1270, %v1346
  %v1348 = vpop.f32.mrb[0].mxu0
  %v1349 = vadd.f32 %v1274, %v1348
  %1350 = vdwg.mxu0
  %v1351 = vmax.f32 %v1347, 0.0
  %v1352 = vmax.f32 %v1349, 0.0
  %v1353 = vadd.f32 %v1215, %v1351
  %v1354 = vadd.f32 %v1216, %v1352
  %v1355 = vld [vmem:[%s13] sm:$0xff]
  %v1356 = vld [vmem:[%s13 + $0x8] sm:$0xff]
  %v1357 = vld [vmem:[%s13 + $0x10] sm:$0xff]
  %v1358 = vld [vmem:[%s13 + $0x18] sm:$0xff]
  %v1359 = vld [vmem:[%s13 + $0x20] sm:$0xff]
  %v1360 = vld [vmem:[%s13 + $0x28] sm:$0xff]
  %v1361 = vld [vmem:[%s13 + $0x30] sm:$0xff]
  %v1362 = vld [vmem:[%s13 + $0x38] sm:$0xff]
  %v1363 = vld [vmem:[%s13 + $0x40] sm:$0xff]
  %v1364 = vld [vmem:[%s13 + $0x48] sm:$0xff]
  %v1365 = vld [vmem:[%s13 + $0x50] sm:$0xff]
  %v1366 = vld [vmem:[%s13 + $0x58] sm:$0xff]
  %v1367 = vld [vmem:[%s13 + $0x60] sm:$0xff]
  %v1368 = vld [vmem:[%s13 + $0x68] sm:$0xff]
  %v1369 = vld [vmem:[%s13 + $0x70] sm:$0xff]
  %v1370 = vld [vmem:[%s13 + $0x78] sm:$0xff]
  %v1371 = vld [vmem:[%s13 + $0x80] sm:$0xff]
  %v1372 = vld [vmem:[%s13 + $0x88] sm:$0xff]
  %v1373 = vld [vmem:[%s13 + $0x90] sm:$0xff]
  %v1374 = vld [vmem:[%s13 + $0x98] sm:$0xff]
  %v1375 = vld [vmem:[%s13 + $0xa0] sm:$0xff]
  %v1376 = vld [vmem:[%s13 + $0xa8] sm:$0xff]
  %v1377 = vld [vmem:[%s13 + $0xb0] sm:$0xff]
  %v1378 = vld [vmem:[%s13 + $0xb8] sm:$0xff]
  %v1379 = vld [vmem:[%s13 + $0xc0] sm:$0xff]
  %v1380 = vld [vmem:[%s13 + $0xc8] sm:$0xff]
  %v1381 = vld [vmem:[%s13 + $0xd0] sm:$0xff]
  %v1382 = vld [vmem:[%s13 + $0xd8] sm:$0xff]
  %v1383 = vld [vmem:[%s13 + $0xe0] sm:$0xff]
  %v1384 = vld [vmem:[%s13 + $0xe8] sm:$0xff]
  %v1385 = vld [vmem:[%s13 + $0xf0] sm:$0xff]
  %v1386 = vld [vmem:[%s13 + $0xf8] sm:$0xff]
  %v1387 = vld [vmem:[%s13 + $0x100] sm:$0xff]
  %v1388 = vld [vmem:[%s13 + $0x108] sm:$0xff]
  %v1389 = vld [vmem:[%s13 + $0x110] sm:$0xff]
  %v1390 = vld [vmem:[%s13 + $0x118] sm:$0xff]
  %v1391 = vld [vmem:[%s13 + $0x120] sm:$0xff]
  %v1392 = vld [vmem:[%s13 + $0x128] sm:$0xff]
  %v1393 = vld [vmem:[%s13 + $0x130] sm:$0xff]
  %v1394 = vld [vmem:[%s13 + $0x138] sm:$0xff]
  %v1395 = vld [vmem:[%s13 + $0x140] sm:$0xff]
  %v1396 = vld [vmem:[%s13 + $0x148] sm:$0xff]
  %v1397 = vld [vmem:[%s13 + $0x150] sm:$0xff]
  %v1398 = vld [vmem:[%s13 + $0x158] sm:$0xff]
  %v1399 = vld [vmem:[%s13 + $0x160] sm:$0xff]
  %v1400 = vld [vmem:[%s13 + $0x168] sm:$0xff]
  %v1401 = vld [vmem:[%s13 + $0x170] sm:$0xff]
  %v1402 = vld [vmem:[%s13 + $0x178] sm:$0xff]
  %v1403 = vld [vmem:[%s14] sm:$0x3]
  %v1405 = vlaneseq
  %v1406 = vshrl.u32 %v1405, 7
  %v1407 = vsub.s32 0, %v1406
  %v1408 = vrot.slane %v1403, %v1407
  %v1409 = vlaneseq
  %v1410 = vshrl.u32 %v1409, 7
  %v1411 = vsub.s32 1, %v1410
  %v1412 = vrot.slane %v1403, %v1411
  %v1416 = vsel %vm198, %v1354, 0
  %1418 = vmatprep.subr.mxu0 %v1356
  %1419 = vmatpush1.msra.mxu0 %v1355
  %1420 = vmatprep.subr.mxu0 %v1358
  %1421 = vmatpush1.msra.mxu0 %v1357
  %1422 = vmatprep.subr.mxu0 %v1360
  %1423 = vmatpush1.msra.mxu0 %v1359
  %1424 = vmatprep.subr.mxu0 %v1362
  %1425 = vmatpush1.msra.mxu0 %v1361
  %1426 = vmatprep.subr.mxu0 %v1364
  %1427 = vmatpush1.msra.mxu0 %v1363
  %1428 = vmatprep.subr.mxu0 %v1366
  %1429 = vmatpush1.msra.mxu0 %v1365
  %1430 = vmatprep.subr.mxu0 %v1368
  %1431 = vmatpush1.msra.mxu0 %v1367
  %1432 = vmatprep.subr.mxu0 %v1370
  %1433 = vmatpush1.msra.mxu0 %v1369
  %1434 = vmatprep.subr.mxu0 %v1372
  %1435 = vmatpush1.msra.mxu0 %v1371
  %1436 = vmatprep.subr.mxu0 %v1374
  %1437 = vmatpush1.msra.mxu0 %v1373
  %1438 = vmatprep.subr.mxu0 %v1376
  %1439 = vmatpush1.msra.mxu0 %v1375
  %1440 = vmatprep.subr.mxu0 %v1378
  %1441 = vmatpush1.msra.mxu0 %v1377
  %1442 = vmatprep.subr.mxu0 %v1380
  %1443 = vmatpush1.msra.mxu0 %v1379
  %1444 = vmatprep.subr.mxu0 %v1382
  %1445 = vmatpush1.msra.mxu0 %v1381
  %1446 = vmatprep.subr.mxu0 %v1384
  %1447 = vmatpush1.msra.mxu0 %v1383
  %1448 = vmatprep.subr.mxu0 %v1386
  %1449 = vmatpush1.msra.mxu0 %v1385
  %1450 = vmatprep.subr.mxu0 %v1388
  %1451 = vmatpush1.msra.mxu0 %v1387
  %1452 = vmatprep.subr.mxu0 %v1390
  %1453 = vmatpush1.msra.mxu0 %v1389
  %1454 = vmatprep.subr.mxu0 %v1392
  %1455 = vmatpush1.msra.mxu0 %v1391
  %1456 = vmatprep.subr.mxu0 %v1394
  %1457 = vmatpush1.msra.mxu0 %v1393
  %1458 = vmatprep.subr.mxu0 %v1396
  %1459 = vmatpush1.msra.mxu0 %v1395
  %1460 = vmatprep.subr.mxu0 %v1398
  %1461 = vmatpush1.msra.mxu0 %v1397
  %1462 = vmatprep.subr.mxu0 %v1400
  %1463 = vmatpush1.msra.mxu0 %v1399
  %1464 = vmatprep.subr.mxu0 %v1402
  %1465 = vmatpush1.msra.mxu0 %v1401
  %1466 = vmatprep.subr.mxu0 0.0
  %1467 = vmatpush1.msra.mxu0 0.0
  %1468 = vmatprep.subr.mxu0 0.0
  %1469 = vmatpush1.msra.mxu0 0.0
  %1470 = vmatprep.subr.mxu0 0.0
  %1471 = vmatpush1.msra.mxu0 0.0
  %1472 = vmatprep.subr.mxu0 0.0
  %1473 = vmatpush1.msra.mxu0 0.0
  %1474 = vmatprep.subr.mxu0 0.0
  %1475 = vmatpush1.msra.mxu0 0.0
  %1476 = vmatprep.subr.mxu0 0.0
  %1477 = vmatpush1.msra.mxu0 0.0
  %1478 = vmatprep.subr.mxu0 0.0
  %1479 = vmatpush1.msra.mxu0 0.0
  %1480 = vmatprep.subr.mxu0 0.0
  %1481 = vmatpush1.msra.mxu0 0.0
  %1482 = vmatprep.mubr.f32.mxu0 %v1416
  %1483 = vmatmul.mubr.f32.gmra.mrb[0].mxu0 %v1353
  %v1484 = vpop.f32.mrb[0].mxu0
  %v1485 = vadd.f32 %v1408, %v1484
  %v1486 = vpop.f32.mrb[0].mxu0
  %v1487 = vadd.f32 %v1412, %v1486
  %1488 = vdwg.mxu0
  %v1489 = vld [vmem:[%s15] sm:$0xff]
  %v1490 = vld [vmem:[%s15 + $0x8] sm:$0xff]
  %v1491 = vld [vmem:[%s15 + $0x10] sm:$0xff]
  %v1492 = vld [vmem:[%s15 + $0x18] sm:$0xff]
  %vm1493 = vcmask 261120
  %v1495 = vsel %vm1493, %v1487, 0
  %1497 = vmatprep.subr.mxu0 0.0
  %1498 = vmatpush1.msra.mxu0 %v1489
  %1499 = vmatprep.subr.mxu0 0.0
  %1500 = vmatpush1.msra.mxu0 %v1490
  %1501 = vmatprep.subr.mxu0 0.0
  %1502 = vmatpush1.msra.mxu0 %v1491
  %1503 = vmatprep.subr.mxu0 0.0
  %1504 = vmatpush1.msra.mxu0 %v1492
  %1505 = vmatprep.subr.mxu0 0.0
  %1506 = vmatpush1.msra.mxu0 0.0
  %1507 = vmatprep.subr.mxu0 0.0
  %1508 = vmatpush1.msra.mxu0 0.0
  %1509 = vmatprep.subr.mxu0 0.0
  %1510 = vmatpush1.msra.mxu0 0.0
  %1511 = vmatprep.subr.mxu0 0.0
  %1512 = vmatpush1.msra.mxu0 0.0
  %1513 = vmatprep.subr.mxu0 0.0
  %1514 = vmatpush1.msra.mxu0 0.0
  %1515 = vmatprep.subr.mxu0 0.0
  %1516 = vmatpush1.msra.mxu0 0.0
  %1517 = vmatprep.subr.mxu0 0.0
  %1518 = vmatpush1.msra.mxu0 0.0
  %1519 = vmatprep.subr.mxu0 0.0
  %1520 = vmatpush1.msra.mxu0 0.0
  %1521 = vmatprep.subr.mxu0 0.0
  %1522 = vmatpush1.msra.mxu0 0.0
  %1523 = vmatprep.subr.mxu0 0.0
  %1524 = vmatpush1.msra.mxu0 0.0
  %1525 = vmatprep.subr.mxu0 0.0
  %1526 = vmatpush1.msra.mxu0 0.0
  %1527 = vmatprep.subr.mxu0 0.0
  %1528 = vmatpush1.msra.mxu0 0.0
  %1529 = vmatprep.subr.mxu0 0.0
  %1530 = vmatpush1.msra.mxu0 0.0
  %1531 = vmatprep.subr.mxu0 0.0
  %1532 = vmatpush1.msra.mxu0 0.0
  %1533 = vmatprep.subr.mxu0 0.0
  %1534 = vmatpush1.msra.mxu0 0.0
  %1535 = vmatprep.subr.mxu0 0.0
  %1536 = vmatpush1.msra.mxu0 0.0
  %1537 = vmatprep.subr.mxu0 0.0
  %1538 = vmatpush1.msra.mxu0 0.0
  %1539 = vmatprep.subr.mxu0 0.0
  %1540 = vmatpush1.msra.mxu0 0.0
  %1541 = vmatprep.subr.mxu0 0.0
  %1542 = vmatpush1.msra.mxu0 0.0
  %1543 = vmatprep.subr.mxu0 0.0
  %1544 = vmatpush1.msra.mxu0 0.0
  %1545 = vmatprep.subr.mxu0 0.0
  %1546 = vmatpush1.msra.mxu0 0.0
  %1547 = vmatprep.subr.mxu0 0.0
  %1548 = vmatpush1.msra.mxu0 0.0
  %1549 = vmatprep.subr.mxu0 0.0
  %1550 = vmatpush1.msra.mxu0 0.0
  %1551 = vmatprep.subr.mxu0 0.0
  %1552 = vmatpush1.msra.mxu0 0.0
  %1553 = vmatprep.subr.mxu0 0.0
  %1554 = vmatpush1.msra.mxu0 0.0
  %1555 = vmatprep.subr.mxu0 0.0
  %1556 = vmatpush1.msra.mxu0 0.0
  %1557 = vmatprep.subr.mxu0 0.0
  %1558 = vmatpush1.msra.mxu0 0.0
  %1559 = vmatprep.subr.mxu0 0.0
  %1560 = vmatpush1.msra.mxu0 0.0
  %1561 = vmatprep.mubr.f32.mxu0 0.0
  %1562 = vmatmul.mubr.f32.gmra.mrb[0].mxu0 %v1495
  %v1563 = vpop.f32.mrb[0].mxu0
  %v1564 = vadd.f32 0.0, %v1563
  %v1565 = vpop.f32.mrb[0].mxu0
  %1566 = vdwg.mxu0
  %v1567 = vld [vmem:[%s16] sm:$0xff]
  %v1568 = vld [vmem:[%s16 + $0x8] sm:$0xff]
  %v1569 = vld [vmem:[%s16 + $0x10] sm:$0xff]
  %v1570 = vld [vmem:[%s16 + $0x18] sm:$0xff]
  %1571 = vmatprep.subr.mxu0 0.0
  %1572 = vmatpush1.msra.mxu0 %v1567
  %1573 = vmatprep.subr.mxu0 0.0
  %1574 = vmatpush1.msra.mxu0 %v1568
  %1575 = vmatprep.subr.mxu0 0.0
  %1576 = vmatpush1.msra.mxu0 %v1569
  %1577 = vmatprep.subr.mxu0 0.0
  %1578 = vmatpush1.msra.mxu0 %v1570
  %1579 = vmatprep.subr.mxu0 0.0
  %1580 = vmatpush1.msra.mxu0 0.0
  %1581 = vmatprep.subr.mxu0 0.0
  %1582 = vmatpush1.msra.mxu0 0.0
  %1583 = vmatprep.subr.mxu0 0.0
  %1584 = vmatpush1.msra.mxu0 0.0
  %1585 = vmatprep.subr.mxu0 0.0
  %1586 = vmatpush1.msra.mxu0 0.0
  %1587 = vmatprep.subr.mxu0 0.0
  %1588 = vmatpush1.msra.mxu0 0.0
  %1589 = vmatprep.subr.mxu0 0.0
  %1590 = vmatpush1.msra.mxu0 0.0
  %1591 = vmatprep.subr.mxu0 0.0
  %1592 = vmatpush1.msra.mxu0 0.0
  %1593 = vmatprep.subr.mxu0 0.0
  %1594 = vmatpush1.msra.mxu0 0.0
  %1595 = vmatprep.subr.mxu0 0.0
  %1596 = vmatpush1.msra.mxu0 0.0
  %1597 = vmatprep.subr.mxu0 0.0
  %1598 = vmatpush1.msra.mxu0 0.0
  %1599 = vmatprep.subr.mxu0 0.0
  %1600 = vmatpush1.msra.mxu0 0.0
  %1601 = vmatprep.subr.mxu0 0.0
  %1602 = vmatpush1.msra.mxu0 0.0
  %1603 = vmatprep.subr.mxu0 0.0
  %1604 = vmatpush1.msra.mxu0 0.0
  %1605 = vmatprep.subr.mxu0 0.0
  %1606 = vmatpush1.msra.mxu0 0.0
  %1607 = vmatprep.subr.mxu0 0.0
  %1608 = vmatpush1.msra.mxu0 0.0
  %1609 = vmatprep.subr.mxu0 0.0
  %1610 = vmatpush1.msra.mxu0 0.0
  %1611 = vmatprep.subr.mxu0 0.0
  %1612 = vmatpush1.msra.mxu0 0.0
  %1613 = vmatprep.subr.mxu0 0.0
  %1614 = vmatpush1.msra.mxu0 0.0
  %1615 = vmatprep.subr.mxu0 0.0
  %1616 = vmatpush1.msra.mxu0 0.0
  %1617 = vmatprep.subr.mxu0 0.0
  %1618 = vmatpush1.msra.mxu0 0.0
  %1619 = vmatprep.subr.mxu0 0.0
  %1620 = vmatpush1.msra.mxu0 0.0
  %1621 = vmatprep.subr.mxu0 0.0
  %1622 = vmatpush1.msra.mxu0 0.0
  %1623 = vmatprep.subr.mxu0 0.0
  %1624 = vmatpush1.msra.mxu0 0.0
  %1625 = vmatprep.subr.mxu0 0.0
  %1626 = vmatpush1.msra.mxu0 0.0
  %1627 = vmatprep.subr.mxu0 0.0
  %1628 = vmatpush1.msra.mxu0 0.0
  %1629 = vmatprep.subr.mxu0 0.0
  %1630 = vmatpush1.msra.mxu0 0.0
  %1631 = vmatprep.subr.mxu0 0.0
  %1632 = vmatpush1.msra.mxu0 0.0
  %1633 = vmatprep.subr.mxu0 0.0
  %1634 = vmatpush1.msra.mxu0 0.0
  %1635 = vmatprep.mubr.f32.mxu0 0.0
  %1636 = vmatmul.mubr.f32.gmra.mrb[0].mxu0 %v1495
  %v1637 = vpop.f32.mrb[0].mxu0
  %v1638 = vadd.f32 0.0, %v1637
  %v1639 = vpop.f32.mrb[0].mxu0
  %1640 = vdwg.mxu0
  %v1641 = vmul.f32 %v1564, %v1638
  %v1642 = vld [vmem:[%s17] sm:$0xff]
  %v1643 = vld [vmem:[%s17 + $0x8] sm:$0xff]
  %v1644 = vld [vmem:[%s17 + $0x10] sm:$0xff]
  %v1645 = vld [vmem:[%s17 + $0x18] sm:$0xff]
  %v1646 = vld [vmem:[%s17 + $0x20] sm:$0xff]
  %v1647 = vld [vmem:[%s17 + $0x28] sm:$0xff]
  %v1648 = vld [vmem:[%s17 + $0x30] sm:$0xff]
  %v1649 = vld [vmem:[%s17 + $0x38] sm:$0xff]
  %v1650 = vld [vmem:[%s17 + $0x40] sm:$0xff]
  %v1651 = vld [vmem:[%s17 + $0x48] sm:$0xff]
  %v1652 = vld [vmem:[%s17 + $0x50] sm:$0xff]
  %v1653 = vld [vmem:[%s17 + $0x58] sm:$0xff]
  %v1654 = vld [vmem:[%s17 + $0x60] sm:$0xff]
  %v1655 = vld [vmem:[%s17 + $0x68] sm:$0xff]
  %v1656 = vld [vmem:[%s17 + $0x70] sm:$0xff]
  %v1657 = vld [vmem:[%s17 + $0x78] sm:$0xff]
  %1658 = vmatprep.subr.mxu0 0.0
  %1659 = vmatpush1.msra.mxu0 %v1642
  %1660 = vmatprep.subr.mxu0 0.0
  %1661 = vmatpush1.msra.mxu0 %v1643
  %1662 = vmatprep.subr.mxu0 0.0
  %1663 = vmatpush1.msra.mxu0 %v1644
  %1664 = vmatprep.subr.mxu0 0.0
  %1665 = vmatpush1.msra.mxu0 %v1645
  %1666 = vmatprep.subr.mxu0 0.0
  %1667 = vmatpush1.msra.mxu0 %v1646
  %1668 = vmatprep.subr.mxu0 0.0
  %1669 = vmatpush1.msra.mxu0 %v1647
  %1670 = vmatprep.subr.mxu0 0.0
  %1671 = vmatpush1.msra.mxu0 %v1648
  %1672 = vmatprep.subr.mxu0 0.0
  %1673 = vmatpush1.msra.mxu0 %v1649
  %1674 = vmatprep.subr.mxu0 0.0
  %1675 = vmatpush1.msra.mxu0 %v1650
  %1676 = vmatprep.subr.mxu0 0.0
  %1677 = vmatpush1.msra.mxu0 %v1651
  %1678 = vmatprep.subr.mxu0 0.0
  %1679 = vmatpush1.msra.mxu0 %v1652
  %1680 = vmatprep.subr.mxu0 0.0
  %1681 = vmatpush1.msra.mxu0 %v1653
  %1682 = vmatprep.subr.mxu0 0.0
  %1683 = vmatpush1.msra.mxu0 %v1654
  %1684 = vmatprep.subr.mxu0 0.0
  %1685 = vmatpush1.msra.mxu0 %v1655
  %1686 = vmatprep.subr.mxu0 0.0
  %1687 = vmatpush1.msra.mxu0 %v1656
  %1688 = vmatprep.subr.mxu0 0.0
  %1689 = vmatpush1.msra.mxu0 %v1657
  %1690 = vmatprep.subr.mxu0 0.0
  %1691 = vmatpush1.msra.mxu0 0.0
  %1692 = vmatprep.subr.mxu0 0.0
  %1693 = vmatpush1.msra.mxu0 0.0
  %1694 = vmatprep.subr.mxu0 0.0
  %1695 = vmatpush1.msra.mxu0 0.0
  %1696 = vmatprep.subr.mxu0 0.0
  %1697 = vmatpush1.msra.mxu0 0.0
  %1698 = vmatprep.subr.mxu0 0.0
  %1699 = vmatpush1.msra.mxu0 0.0
  %1700 = vmatprep.subr.mxu0 0.0
  %1701 = vmatpush1.msra.mxu0 0.0
  %1702 = vmatprep.subr.mxu0 0.0
  %1703 = vmatpush1.msra.mxu0 0.0
  %1704 = vmatprep.subr.mxu0 0.0
  %1705 = vmatpush1.msra.mxu0 0.0
  %1706 = vmatprep.subr.mxu0 0.0
  %1707 = vmatpush1.msra.mxu0 0.0
  %1708 = vmatprep.subr.mxu0 0.0
  %1709 = vmatpush1.msra.mxu0 0.0
  %1710 = vmatprep.subr.mxu0 0.0
  %1711 = vmatpush1.msra.mxu0 0.0
  %1712 = vmatprep.subr.mxu0 0.0
  %1713 = vmatpush1.msra.mxu0 0.0
  %1714 = vmatprep.subr.mxu0 0.0
  %1715 = vmatpush1.msra.mxu0 0.0
  %1716 = vmatprep.subr.mxu0 0.0
  %1717 = vmatpush1.msra.mxu0 0.0
  %1718 = vmatprep.subr.mxu0 0.0
  %1719 = vmatpush1.msra.mxu0 0.0
  %1720 = vmatprep.subr.mxu0 0.0
  %1721 = vmatpush1.msra.mxu0 0.0
  %1722 = vmatprep.mubr.f32.mxu0 0.0
  %1723 = vmatmul.mubr.f32.gmra.mrb[0].mxu0 %v1641
  %v1724 = vpop.f32.mrb[0].mxu0
  %v1725 = vadd.f32 0.0, %v1724
  %v1726 = vpop.f32.mrb[0].mxu0
  %1727 = vdwg.mxu0
  %v1728 = vadd.f32 %v1485, %v1725
  %v1729 = vmax.f32 %v1487, 0.0
  %vm1730 = vcmp.ne.f32.partialorder %v1487, %v1487
  %v1731 = vadd.f32 %v1487, 0.0
  %v1732 = vand.u32 2147483647, %v1487
  %v1733 = vsub.f32 0.0, %v1732
  %v1734 = vmul.f32 %v1733, 1.442695
  %v1735 = vpow.pop %v1734
  %v1736 = vadd.f32 %v1735, 1.0
  %v1737 = vlog2.pop %v1736
  %v1738 = vmul.f32 %v1737, 0.6931472
  %v1739 = vmul.f32 -0.5, %v1735
  %v1740 = vadd.f32 %v1739, 1.0
  %v1741 = vmul.f32 %v1740, %v1735
  %v1742 = vand.u32 2147483647, %v1735
  %vm1743 = vcmp.lt.f32.partialorder %v1742, 0.0004427343
  %v1744 = vsel %vm1743, %v1741, %v1738
  %v1745 = vadd.f32 %v1729, %v1744
  %v1746 = vsel %vm1730, %v1731, %v1745
  %v1747 = vld [vmem:[%s18] sm:$0xff]
  %1749 = vrot.lane.b32.xlu0 %v1746, 96
  %v1750 = vpop.permute.xlu0 %1749
  %v1751 = vsel %vm801, %v1750, 0
  %1753 = vmatprep.subr.mxu0 0.0
  %1754 = vmatpush1.msra.mxu0 %v1747
  %1755 = vmatprep.subr.mxu0 0.0
  %1756 = vmatpush1.msra.mxu0 0.0
  %1757 = vmatprep.subr.mxu0 0.0
  %1758 = vmatpush1.msra.mxu0 0.0
  %1759 = vmatprep.subr.mxu0 0.0
  %1760 = vmatpush1.msra.mxu0 0.0
  %1761 = vmatprep.subr.mxu0 0.0
  %1762 = vmatpush1.msra.mxu0 0.0
  %1763 = vmatprep.subr.mxu0 0.0
  %1764 = vmatpush1.msra.mxu0 0.0
  %1765 = vmatprep.subr.mxu0 0.0
  %1766 = vmatpush1.msra.mxu0 0.0
  %1767 = vmatprep.subr.mxu0 0.0
  %1768 = vmatpush1.msra.mxu0 0.0
  %1769 = vmatprep.subr.mxu0 0.0
  %1770 = vmatpush1.msra.mxu0 0.0
  %1771 = vmatprep.subr.mxu0 0.0
  %1772 = vmatpush1.msra.mxu0 0.0
  %1773 = vmatprep.subr.mxu0 0.0
  %1774 = vmatpush1.msra.mxu0 0.0
  %1775 = vmatprep.subr.mxu0 0.0
  %1776 = vmatpush1.msra.mxu0 0.0
  %1777 = vmatprep.subr.mxu0 0.0
  %1778 = vmatpush1.msra.mxu0 0.0
  %1779 = vmatprep.subr.mxu0 0.0
  %1780 = vmatpush1.msra.mxu0 0.0
  %1781 = vmatprep.subr.mxu0 0.0
  %1782 = vmatpush1.msra.mxu0 0.0
  %1783 = vmatprep.subr.mxu0 0.0
  %1784 = vmatpush1.msra.mxu0 0.0
  %1785 = vmatprep.subr.mxu0 0.0
  %1786 = vmatpush1.msra.mxu0 0.0
  %1787 = vmatprep.subr.mxu0 0.0
  %1788 = vmatpush1.msra.mxu0 0.0
  %1789 = vmatprep.subr.mxu0 0.0
  %1790 = vmatpush1.msra.mxu0 0.0
  %1791 = vmatprep.subr.mxu0 0.0
  %1792 = vmatpush1.msra.mxu0 0.0
  %1793 = vmatprep.subr.mxu0 0.0
  %1794 = vmatpush1.msra.mxu0 0.0
  %1795 = vmatprep.subr.mxu0 0.0
  %1796 = vmatpush1.msra.mxu0 0.0
  %1797 = vmatprep.subr.mxu0 0.0
  %1798 = vmatpush1.msra.mxu0 0.0
  %1799 = vmatprep.subr.mxu0 0.0
  %1800 = vmatpush1.msra.mxu0 0.0
  %1801 = vmatprep.subr.mxu0 0.0
  %1802 = vmatpush1.msra.mxu0 0.0
  %1803 = vmatprep.subr.mxu0 0.0
  %1804 = vmatpush1.msra.mxu0 0.0
  %1805 = vmatprep.subr.mxu0 0.0
  %1806 = vmatpush1.msra.mxu0 0.0
  %1807 = vmatprep.subr.mxu0 0.0
  %1808 = vmatpush1.msra.mxu0 0.0
  %1809 = vmatprep.subr.mxu0 0.0
  %1810 = vmatpush1.msra.mxu0 0.0
  %1811 = vmatprep.subr.mxu0 0.0
  %1812 = vmatpush1.msra.mxu0 0.0
  %1813 = vmatprep.subr.mxu0 0.0
  %1814 = vmatpush1.msra.mxu0 0.0
  %1815 = vmatprep.subr.mxu0 0.0
  %1816 = vmatpush1.msra.mxu0 0.0
  %1817 = vmatprep.mubr.f32.mxu0 0.0
  %1818 = vmatmul.mubr.f32.gmra.mrb[0].mxu0 %v1751
  %v1819 = vpop.f32.mrb[0].mxu0
  %v1820 = vadd.f32 0.0, %v1819
  %v1821 = vpop.f32.mrb[0].mxu0
  %1822 = vdwg.mxu0
  %v1823 = vadd.f32 %v1728, %v1820
  %1824 = vst [vmem:[%s19] sm:$0x3] %v1823
  // Predicated region
  $region78: #{encoder_forward.1} parent=0 // pred_check
    _
  $region79: #{encoder_forward.1} parent=0 // pred_check_branch
    %1826 = sbr.rel (0) target = $region81
  $region80: #{encoder_forward.1} parent=0 // pred_region
    _
  $region81: #{encoder_forward.1} parent=0 // pred_fallthru
    _
  // Predicated region
  $region82: #{encoder_forward.1} parent=0 // pred_check
    _
  $region83: #{encoder_forward.1} parent=0 // pred_check_branch
    %1828 = sbr.rel (0) target = $region85
  $region84: #{encoder_forward.1} parent=0 // pred_region
    _
  $region85: #{encoder_forward.1} parent=0 // pred_fallthru
    _

</llo_original>
